<compile_context>
chip_gen: v7x
topology: tpu7x:2x2x1
jax: 0.10.0
libtpu: 0.0.40
codegen_flags: <defaults>
</compile_context>

<pallas_src>
import math

import jax
import jax.numpy as jnp
from jax import lax
from jax.experimental import pallas as pl
from jax.experimental.pallas import tpu as pltpu


def _round_up(x, m):
    return ((x + m - 1) // m) * m


def _belief_kernel(x_ref, w_ref, o_ref):
    # x_ref: (tile, RP)       lane-folded input rows (input dtype)
    # w_ref: (RP, RP*C)       sparse scatter-weight matrix, f32
    # o_ref: (tile, RP*C)     output, already lane-dense in the final (.., p, c) order
    #
    # One MXU matmul does the broadcast-multiply AND the (P, C) interleave at once;
    # the output leaves the kernel in its final layout -> no wrapper-side transpose,
    # and full-width 128-lane-aligned stores (lane dim is a multiple of 128).
    o_ref[...] = jnp.dot(
        x_ref[...].astype(jnp.float32),
        w_ref[...],
        preferred_element_type=jnp.float32,
        precision=lax.Precision.HIGHEST,      # keep full f32 weight precision
    ).astype(o_ref.dtype)


def belief_layer(inputs, beta, *, max_tile_rows=1024, out_dtype=None, eps=1e-12):
    """inputs: (B, ..., P), beta: (C, P) -> (B, ..., P, C)

    out[..., p, c] = inputs[..., p] * beta[c, p]**2 / (sum_c' beta[c', p]**2 + eps)
    """
    C, P = beta.shape
    batch_dims = inputs.shape[:-1]
    N = math.prod(batch_dims)
    in_dtype = inputs.dtype
    out_dtype = in_dtype if out_dtype is None else jnp.dtype(out_dtype)

    # ---- one-time parameter transform (XLA side, f32) ----------------------------
    beta2 = jnp.square(beta.astype(jnp.float32))
    u = beta2 / (jnp.sum(beta2, axis=0, keepdims=True) + eps)         # (C, P)

    # Fold factor so the folded input last dim is a multiple of 128 lanes.
    R = 128 // math.gcd(P, 128)
    RP = R * P

    # Sparse scatter-weight matrix: W[r*P+p, (r*P+p)*C + c] = u[c, p].
    # x_fold @ W emits the output already interleaved as (..., r, p, c), so the final
    # unfold is a pure row-major reshape (no transpose, no extra HBM round-trip).
    # TODO(synk): if P shares no large factor with 128 and C is large, W grows as
    # (RP, RP*C); fall back to a per-class-slab kernel in that regime.
    u_rep = jnp.tile(u.T, (R, 1))                                     # (RP, C), f32
    w = (jnp.eye(RP, dtype=jnp.float32)[:, :, None] * u_rep[:, None, :]
         ).reshape(RP, RP * C)                                        # (RP, RP*C)

    # ---- tile sizing (VMEM budget + megacore-friendly grid) -----------------------
    in_item = jnp.dtype(in_dtype).itemsize
    out_item = jnp.dtype(out_dtype).itemsize
    sub = max(8, 32 // in_item, 32 // out_item)    # min sublane multiple per dtype
    M = pl.cdiv(N, R)                              # folded row count

    # Double-buffered input + output blocks (+ double-buffered W) must fit the budget;
    # budget kept under v5e's 16 MiB scoped default ceiling-ish and well under v7x VMEM.
    vmem_budget = 20 * 1024 * 1024 - 2 * RP * RP * C * 4
    bytes_per_row = 2 * RP * in_item + 2 * RP * C * out_item
    tile_vmem = max(sub, (vmem_budget // bytes_per_row) // sub * sub)
    # Keep >= ~8 grid steps on large inputs (so v7x's 2 TCs both get work and the
    # DMA pipeline has depth), but never shrink a tile below 512 rows for that.
    tile_par = max(512, _round_up(pl.cdiv(M, 8), sub))
    tile = max(sub, min(max_tile_rows, tile_vmem, tile_par, _round_up(M, sub)))

    M_pad = _round_up(M, tile)
    grid = (M_pad // tile,)

    # ---- single merged pad + lane fold: (N, P) -> (M_pad, R*P) --------------------
    x2 = inputs.reshape(N, P)
    total_rows = M_pad * R
    if total_rows != N:
        x2 = jnp.pad(x2, ((0, total_rows - N), (0, 0)))
    x_fold = x2.reshape(M_pad, RP)

    y = pl.pallas_call(
        _belief_kernel,
        out_shape=jax.ShapeDtypeStruct((M_pad, RP * C), out_dtype),
        grid_spec=pltpu.PrefetchScalarGridSpec(
            num_scalar_prefetch=0,
            grid=grid,
            in_specs=[
                pl.BlockSpec((tile, RP), lambda i: (i, 0)),
                pl.BlockSpec((RP, RP * C), lambda i: (0, 0)),   # constant across steps
            ],
            out_specs=pl.BlockSpec((tile, RP * C), lambda i: (i, 0)),
        ),
        compiler_params=pltpu.CompilerParams(
            dimension_semantics=("parallel",),
            vmem_limit_bytes=32 * 1024 * 1024,
        ),
    )(x_fold, w)

    # ---- unfold: pure row-major reshapes + contiguous prefix slice (no transpose) --
    y = y.reshape(M_pad * R, P, C)[:N]
    return y.reshape(*batch_dims, P, C)


if __name__ == "__main__":
    key = jax.random.PRNGKey(0)
    k_x, k_beta = jax.random.split(key)

    B, H, W = 2, 8, 8
    n_prototypes = 16   # P
    num_class = 4       # C

    inputs = jax.random.normal(k_x, (B, H, W, n_prototypes), dtype=jnp.float32)
    beta = jax.random.normal(k_beta, (num_class, n_prototypes), dtype=jnp.float32)

    out = jax.block_until_ready(belief_layer(inputs, beta))

    # pure-JAX reference of the forward
    beta2 = jnp.square(beta)
    u = beta2 / (jnp.sum(beta2, axis=0, keepdims=True) + 1e-12)
    ref = jnp.einsum("cp,bhwp->bhwpc", u, inputs)

    assert out.shape == (B, H, W, n_prototypes, num_class)
    assert jnp.allclose(out, ref, atol=1e-5, rtol=1e-5)

    print("KERNEL_OK")
</pallas_src>

<mosaic_0001>
module attributes {stable_mosaic.version = 11 : i64} {
  func.func @_belief_kernel(%arg0: i32, %arg1: memref<16x128xf32, #tpu.memory_space<vmem>>, %arg2: memref<128x512xf32, #tpu.memory_space<vmem>>, %arg3: memref<16x512xf32, #tpu.memory_space<vmem>>) attributes {dimension_semantics = [#tpu.dimension_semantics<parallel>], iteration_bounds = array<i64: 1>, scalar_prefetch = 0 : i64, scratch_operands = 0 : i64, tpu.core_type = #tpu.core_type<tc>, window_params = [{transform_indices = @transform_0, window_bounds = array<i64: 16, 128>}, {pipeline_mode = #tpu.pipeline_mode<synchronous>, transform_indices = @transform_1, window_bounds = array<i64: 128, 512>}, {transform_indices = @transform_2, window_bounds = array<i64: 16, 512>}]} {
    %c0 = arith.constant 0 : index
    %c0_0 = arith.constant 0 : index
    %0 = vector.load %arg1[%c0, %c0_0] : memref<16x128xf32, #tpu.memory_space<vmem>>, vector<16x128xf32>
    %c0_1 = arith.constant 0 : index
    %c0_2 = arith.constant 0 : index
    %1 = vector.load %arg2[%c0_1, %c0_2] : memref<128x512xf32, #tpu.memory_space<vmem>>, vector<128x512xf32>
    %cst = arith.constant dense<0.000000e+00> : vector<16x512xf32>
    %2 = tpu.matmul %0, %1, %cst {dimension_numbers = #tpu.dot_dimension_numbers<[1], [0], [0], [1], [0, 0, 1, 1], [], []>, precision = #tpu.contract_precision<fp32>} : vector<16x128xf32>, vector<128x512xf32>, vector<16x512xf32> -> vector<16x512xf32>
    %c0_3 = arith.constant 0 : index
    %c0_4 = arith.constant 0 : index
    %3 = vector.load %arg3[%c0_3, %c0_4] : memref<16x512xf32, #tpu.memory_space<vmem>>, vector<16x512xf32>
    tpu.vector_store %arg3[%c0_3, %c0_4], %2 {strides = array<i32>} : memref<16x512xf32, #tpu.memory_space<vmem>>, vector<16x512xf32>,
    return
  }
  func.func @transform_0(%arg0: i32) -> (i32, i32) {
    %c0_i32 = arith.constant 0 : i32
    %c0_i32_0 = arith.constant 0 : i32
    return %arg0, %c0_i32 : i32, i32
  }
  func.func @transform_1(%arg0: i32) -> (i32, i32) {
    %c0_i32 = arith.constant 0 : i32
    %c0_i32_0 = arith.constant 0 : i32
    %c0_i32_1 = arith.constant 0 : i32
    return %c0_i32, %c0_i32_0 : i32, i32
  }
  func.func @transform_2(%arg0: i32) -> (i32, i32) {
    %c0_i32 = arith.constant 0 : i32
    %c0_i32_0 = arith.constant 0 : i32
    return %arg0, %c0_i32 : i32, i32
  }
}

</mosaic_0001>

<llo_original>
// kernel: tpu_custom_call.1
$region0: #{tpu_custom_call.1}
  #allocation0 [shape = 'u32[]', space=smem, size = 0x4, offset = 0x4, fixed_abs, tag = 'smem constant byte address 0x4 - core index']
  #allocation1 [shape = 'u32[144,128]{1,0:T(1,128)}', space=vmem, size = 0x12000, scoped, tag = 'internal scratch']
  %s0 = inlined_call_operand.hbm [shape: f32[16,128], index: 0, kind: input, shape index: {}]
  %s1 = inlined_call_operand.hbm [shape: f32[128,512], index: 1, kind: input, shape index: {}]
  %s2 = inlined_call_operand.hbm [shape: f32[16,512], index: 2, kind: output, shape index: {}]
  %s3 = sld [smem:[#allocation0]]
  $region26: #{tpu_custom_call.1} parent=0
    _
  %s5 = ssub.s32 1, %s3
  %s6 = scalar_select 0, %s5, %s3
  $region1: #{tpu_custom_call.1} parent=0
    #allocation2 [shape = 'u8[8192]{0}', space=vmem, size = 0x2000, scoped, tag = 'input window, operand 0, single buffered']
    #allocation3 [shape = 's32[1]{0}', space=sflag, size = 0x4, scoped, tag = 'scoped memory for tpu_custom_call.1']
    #allocation4 [shape = 's32[1]{0}', space=sflag, size = 0x4, scoped, tag = 'scoped memory for tpu_custom_call.1']
    #allocation5 [shape = 'u8[262144]{0}', space=vmem, size = 0x40000, scoped, tag = 'input window, operand 1, single buffered']
    #allocation6 [shape = 's32[1]{0}', space=sflag, size = 0x4, scoped, tag = 'scoped memory for tpu_custom_call.1']
    #allocation7 [shape = 'u8[32768]{0}', space=vmem, size = 0x8000, scoped, tag = 'output window, operand 0, single buffered']
    %7 = vsyncpa [#allocation3], 0
    %8 = vsyncpa [#allocation6], 0
    %9 = vsyncpa [#allocation4], 0
    // Predicated region
    $region2: #{tpu_custom_call.1} parent=1 // pred_check
      _
    $region3: #{tpu_custom_call.1} parent=1 // pred_check_branch
      %11 = sbr.rel (0) target = $region5
    $region4: #{tpu_custom_call.1} parent=1 // pred_region
      %s13 = ssub.s32 256, 256
      %14 = vsyncadd [#allocation3], %s13
      %s15 = sshll.u32 [#allocation2], 4
      %s16 = int_to_ptr.vmem [resolvable:$true] %s15
      %21 = dma.hbm_to_vmem [thread:$0]  %s0, 256, %s16, [#allocation3], 128, 128, 8
    $region5: #{tpu_custom_call.1} parent=1 // pred_fallthru
      _
    // Predicated region
    $region6: #{tpu_custom_call.1} parent=1 // pred_check
      _
    $region7: #{tpu_custom_call.1} parent=1 // pred_check_branch
      %23 = sbr.rel (0) target = $region9
    $region8: #{tpu_custom_call.1} parent=1 // pred_region
      %s25 = ssub.s32 8192, 8192
      %26 = vsyncadd [#allocation6], %s25
      %s27 = sshll.u32 [#allocation5], 4
      %s28 = int_to_ptr.vmem [resolvable:$true] %s27
      %33 = dma.hbm_to_vmem [thread:$0]  %s1, 8192, %s28, [#allocation6], 512, 512, 32
    $region9: #{tpu_custom_call.1} parent=1 // pred_fallthru
      _
    // Predicated region
    $region10: #{tpu_custom_call.1} parent=1 // pred_check
      _
    $region11: #{tpu_custom_call.1} parent=1 // pred_check_branch
      %35 = sbr.rel (0) target = $region13
    $region12: #{tpu_custom_call.1} parent=1 // pred_region
      %36 = dma.done [#allocation3], 256
    $region13: #{tpu_custom_call.1} parent=1 // pred_fallthru
      _
    // Predicated region
    $region14: #{tpu_custom_call.1} parent=1 // pred_check
      _
    $region15: #{tpu_custom_call.1} parent=1 // pred_check_branch
      %38 = sbr.rel (0) target = $region17
    $region16: #{tpu_custom_call.1} parent=1 // pred_region
      %39 = dma.done [#allocation6], 8192
    $region17: #{tpu_custom_call.1} parent=1 // pred_fallthru
      _
    %v40 = vld [vmem:[#allocation2] sm:$0xff]
    %v41 = vld [vmem:[#allocation2 + $0x8] sm:$0xff]
    %v42 = vld [vmem:[#allocation5] sm:$0xff]
    %v43 = vld [vmem:[#allocation5 + $0x8] sm:$0xff]
    %v44 = vld [vmem:[#allocation5 + $0x10] sm:$0xff]
    %v45 = vld [vmem:[#allocation5 + $0x18] sm:$0xff]
    %v46 = vld [vmem:[#allocation5 + $0x20] sm:$0xff]
    %v47 = vld [vmem:[#allocation5 + $0x28] sm:$0xff]
    %v48 = vld [vmem:[#allocation5 + $0x30] sm:$0xff]
    %v49 = vld [vmem:[#allocation5 + $0x38] sm:$0xff]
    %v50 = vld [vmem:[#allocation5 + $0x40] sm:$0xff]
    %v51 = vld [vmem:[#allocation5 + $0x48] sm:$0xff]
    %v52 = vld [vmem:[#allocation5 + $0x50] sm:$0xff]
    %v53 = vld [vmem:[#allocation5 + $0x58] sm:$0xff]
    %v54 = vld [vmem:[#allocation5 + $0x60] sm:$0xff]
    %v55 = vld [vmem:[#allocation5 + $0x68] sm:$0xff]
    %v56 = vld [vmem:[#allocation5 + $0x70] sm:$0xff]
    %v57 = vld [vmem:[#allocation5 + $0x78] sm:$0xff]
    %v58 = vld [vmem:[#allocation5 + $0x80] sm:$0xff]
    %v59 = vld [vmem:[#allocation5 + $0x88] sm:$0xff]
    %v60 = vld [vmem:[#allocation5 + $0x90] sm:$0xff]
    %v61 = vld [vmem:[#allocation5 + $0x98] sm:$0xff]
    %v62 = vld [vmem:[#allocation5 + $0xa0] sm:$0xff]
    %v63 = vld [vmem:[#allocation5 + $0xa8] sm:$0xff]
    %v64 = vld [vmem:[#allocation5 + $0xb0] sm:$0xff]
    %v65 = vld [vmem:[#allocation5 + $0xb8] sm:$0xff]
    %v66 = vld [vmem:[#allocation5 + $0xc0] sm:$0xff]
    %v67 = vld [vmem:[#allocation5 + $0xc8] sm:$0xff]
    %v68 = vld [vmem:[#allocation5 + $0xd0] sm:$0xff]
    %v69 = vld [vmem:[#allocation5 + $0xd8] sm:$0xff]
    %v70 = vld [vmem:[#allocation5 + $0xe0] sm:$0xff]
    %v71 = vld [vmem:[#allocation5 + $0xe8] sm:$0xff]
    %v72 = vld [vmem:[#allocation5 + $0xf0] sm:$0xff]
    %v73 = vld [vmem:[#allocation5 + $0xf8] sm:$0xff]
    %v74 = vld [vmem:[#allocation5 + $0x100] sm:$0xff]
    %v75 = vld [vmem:[#allocation5 + $0x108] sm:$0xff]
    %v76 = vld [vmem:[#allocation5 + $0x110] sm:$0xff]
    %v77 = vld [vmem:[#allocation5 + $0x118] sm:$0xff]
    %v78 = vld [vmem:[#allocation5 + $0x120] sm:$0xff]
    %v79 = vld [vmem:[#allocation5 + $0x128] sm:$0xff]
    %v80 = vld [vmem:[#allocation5 + $0x130] sm:$0xff]
    %v81 = vld [vmem:[#allocation5 + $0x138] sm:$0xff]
    %v82 = vld [vmem:[#allocation5 + $0x140] sm:$0xff]
    %v83 = vld [vmem:[#allocation5 + $0x148] sm:$0xff]
    %v84 = vld [vmem:[#allocation5 + $0x150] sm:$0xff]
    %v85 = vld [vmem:[#allocation5 + $0x158] sm:$0xff]
    %v86 = vld [vmem:[#allocation5 + $0x160] sm:$0xff]
    %v87 = vld [vmem:[#allocation5 + $0x168] sm:$0xff]
    %v88 = vld [vmem:[#allocation5 + $0x170] sm:$0xff]
    %v89 = vld [vmem:[#allocation5 + $0x178] sm:$0xff]
    %v90 = vld [vmem:[#allocation5 + $0x180] sm:$0xff]
    %v91 = vld [vmem:[#allocation5 + $0x188] sm:$0xff]
    %v92 = vld [vmem:[#allocation5 + $0x190] sm:$0xff]
    %v93 = vld [vmem:[#allocation5 + $0x198] sm:$0xff]
    %v94 = vld [vmem:[#allocation5 + $0x1a0] sm:$0xff]
    %v95 = vld [vmem:[#allocation5 + $0x1a8] sm:$0xff]
    %v96 = vld [vmem:[#allocation5 + $0x1b0] sm:$0xff]
    %v97 = vld [vmem:[#allocation5 + $0x1b8] sm:$0xff]
    %v98 = vld [vmem:[#allocation5 + $0x1c0] sm:$0xff]
    %v99 = vld [vmem:[#allocation5 + $0x1c8] sm:$0xff]
    %v100 = vld [vmem:[#allocation5 + $0x1d0] sm:$0xff]
    %v101 = vld [vmem:[#allocation5 + $0x1d8] sm:$0xff]
    %v102 = vld [vmem:[#allocation5 + $0x1e0] sm:$0xff]
    %v103 = vld [vmem:[#allocation5 + $0x1e8] sm:$0xff]
    %v104 = vld [vmem:[#allocation5 + $0x1f0] sm:$0xff]
    %v105 = vld [vmem:[#allocation5 + $0x1f8] sm:$0xff]
    %v106 = vand.u32 %v43, 4294901760
    %107 = vmatprep.subr.mxu0 %v106
    %v108 = vand.u32 %v42, 4294901760
    %109 = vmatpush1.msra.mxu0 %v108
    %v110 = vand.u32 %v47, 4294901760
    %111 = vmatprep.subr.mxu0 %v110
    %v112 = vand.u32 %v46, 4294901760
    %113 = vmatpush1.msra.mxu0 %v112
    %v114 = vand.u32 %v51, 4294901760
    %115 = vmatprep.subr.mxu0 %v114
    %v116 = vand.u32 %v50, 4294901760
    %117 = vmatpush1.msra.mxu0 %v116
    %v118 = vand.u32 %v55, 4294901760
    %119 = vmatprep.subr.mxu0 %v118
    %v120 = vand.u32 %v54, 4294901760
    %121 = vmatpush1.msra.mxu0 %v120
    %v122 = vand.u32 %v59, 4294901760
    %123 = vmatprep.subr.mxu0 %v122
    %v124 = vand.u32 %v58, 4294901760
    %125 = vmatpush1.msra.mxu0 %v124
    %v126 = vand.u32 %v63, 4294901760
    %127 = vmatprep.subr.mxu0 %v126
    %v128 = vand.u32 %v62, 4294901760
    %129 = vmatpush1.msra.mxu0 %v128
    %v130 = vand.u32 %v67, 4294901760
    %131 = vmatprep.subr.mxu0 %v130
    %v132 = vand.u32 %v66, 4294901760
    %133 = vmatpush1.msra.mxu0 %v132
    %v134 = vand.u32 %v71, 4294901760
    %135 = vmatprep.subr.mxu0 %v134
    %v136 = vand.u32 %v70, 4294901760
    %137 = vmatpush1.msra.mxu0 %v136
    %v138 = vand.u32 %v75, 4294901760
    %139 = vmatprep.subr.mxu0 %v138
    %v140 = vand.u32 %v74, 4294901760
    %141 = vmatpush1.msra.mxu0 %v140
    %v142 = vand.u32 %v79, 4294901760
    %143 = vmatprep.subr.mxu0 %v142
    %v144 = vand.u32 %v78, 4294901760
    %145 = vmatpush1.msra.mxu0 %v144
    %v146 = vand.u32 %v83, 4294901760
    %147 = vmatprep.subr.mxu0 %v146
    %v148 = vand.u32 %v82, 4294901760
    %149 = vmatpush1.msra.mxu0 %v148
    %v150 = vand.u32 %v87, 4294901760
    %151 = vmatprep.subr.mxu0 %v150
    %v152 = vand.u32 %v86, 4294901760
    %153 = vmatpush1.msra.mxu0 %v152
    %v154 = vand.u32 %v91, 4294901760
    %155 = vmatprep.subr.mxu0 %v154
    %v156 = vand.u32 %v90, 4294901760
    %157 = vmatpush1.msra.mxu0 %v156
    %v158 = vand.u32 %v95, 4294901760
    %159 = vmatprep.subr.mxu0 %v158
    %v160 = vand.u32 %v94, 4294901760
    %161 = vmatpush1.msra.mxu0 %v160
    %v162 = vand.u32 %v99, 4294901760
    %163 = vmatprep.subr.mxu0 %v162
    %v164 = vand.u32 %v98, 4294901760
    %165 = vmatpush1.msra.mxu0 %v164
    %v166 = vand.u32 %v103, 4294901760
    %167 = vmatprep.subr.mxu0 %v166
    %v168 = vand.u32 %v102, 4294901760
    %169 = vmatpush1.msra.mxu0 %v168
    %170 = vmatprep.subr.mxu0 0.0
    %171 = vmatpush1.msra.mxu0 0.0
    %172 = vmatprep.subr.mxu0 0.0
    %173 = vmatpush1.msra.mxu0 0.0
    %174 = vmatprep.subr.mxu0 0.0
    %175 = vmatpush1.msra.mxu0 0.0
    %176 = vmatprep.subr.mxu0 0.0
    %177 = vmatpush1.msra.mxu0 0.0
    %178 = vmatprep.subr.mxu0 0.0
    %179 = vmatpush1.msra.mxu0 0.0
    %180 = vmatprep.subr.mxu0 0.0
    %181 = vmatpush1.msra.mxu0 0.0
    %182 = vmatprep.subr.mxu0 0.0
    %183 = vmatpush1.msra.mxu0 0.0
    %184 = vmatprep.subr.mxu0 0.0
    %185 = vmatpush1.msra.mxu0 0.0
    %186 = vmatprep.subr.mxu0 0.0
    %187 = vmatpush1.msra.mxu0 0.0
    %188 = vmatprep.subr.mxu0 0.0
    %189 = vmatpush1.msra.mxu0 0.0
    %190 = vmatprep.subr.mxu0 0.0
    %191 = vmatpush1.msra.mxu0 0.0
    %192 = vmatprep.subr.mxu0 0.0
    %193 = vmatpush1.msra.mxu0 0.0
    %194 = vmatprep.subr.mxu0 0.0
    %195 = vmatpush1.msra.mxu0 0.0
    %196 = vmatprep.subr.mxu0 0.0
    %197 = vmatpush1.msra.mxu0 0.0
    %198 = vmatprep.subr.mxu0 0.0
    %199 = vmatpush1.msra.mxu0 0.0
    %200 = vmatprep.subr.mxu0 0.0
    %201 = vmatpush1.msra.mxu0 0.0
    %202 = vmatprep.mubr.f32.mxu0 0.0
    %v203 = vand.u32 %v40, 4294901760
    %v204 = vsub.f32 %v40, %v203
    %v205 = vand.u32 %v204, 4294901760
    %v206 = vsub.f32 %v204, %v205
    %v207 = vand.u32 %v206, 4294901760
    %208 = vmatmul.mubr.f32.gmra.mrb[0].mxu0 %v207
    %v209 = vpop.f32.mrb[0].mxu0
    %v210 = vadd.f32 0.0, %v209
    %v211 = vpop.f32.mrb[0].mxu0
    %v212 = vadd.f32 0.0, %v211
    %213 = vmatprep.mubr.f32.mxu0 0.0
    %v214 = vand.u32 %v41, 4294901760
    %v215 = vsub.f32 %v41, %v214
    %v216 = vand.u32 %v215, 4294901760
    %v217 = vsub.f32 %v215, %v216
    %v218 = vand.u32 %v217, 4294901760
    %219 = vmatmul.mubr.f32.gmra.mrb[0].mxu0 %v218
    %v220 = vpop.f32.mrb[0].mxu0
    %v221 = vadd.f32 0.0, %v220
    %v222 = vpop.f32.mrb[0].mxu0
    %v223 = vadd.f32 0.0, %v222
    %224 = vdwg.mxu0
    %v225 = vand.u32 %v43, 4294901760
    %v226 = vsub.f32 %v43, %v225
    %v227 = vand.u32 %v226, 4294901760
    %v228 = vsub.f32 %v226, %v227
    %v229 = vand.u32 %v228, 4294901760
    %230 = vmatprep.subr.mxu0 %v229
    %v231 = vand.u32 %v42, 4294901760
    %v232 = vsub.f32 %v42, %v231
    %v233 = vand.u32 %v232, 4294901760
    %v234 = vsub.f32 %v232, %v233
    %v235 = vand.u32 %v234, 4294901760
    %236 = vmatpush1.msra.mxu0 %v235
    %v237 = vand.u32 %v47, 4294901760
    %v238 = vsub.f32 %v47, %v237
    %v239 = vand.u32 %v238, 4294901760
    %v240 = vsub.f32 %v238, %v239
    %v241 = vand.u32 %v240, 4294901760
    %242 = vmatprep.subr.mxu0 %v241
    %v243 = vand.u32 %v46, 4294901760
    %v244 = vsub.f32 %v46, %v243
    %v245 = vand.u32 %v244, 4294901760
    %v246 = vsub.f32 %v244, %v245
    %v247 = vand.u32 %v246, 4294901760
    %248 = vmatpush1.msra.mxu0 %v247
    %v249 = vand.u32 %v51, 4294901760
    %v250 = vsub.f32 %v51, %v249
    %v251 = vand.u32 %v250, 4294901760
    %v252 = vsub.f32 %v250, %v251
    %v253 = vand.u32 %v252, 4294901760
    %254 = vmatprep.subr.mxu0 %v253
    %v255 = vand.u32 %v50, 4294901760
    %v256 = vsub.f32 %v50, %v255
    %v257 = vand.u32 %v256, 4294901760
    %v258 = vsub.f32 %v256, %v257
    %v259 = vand.u32 %v258, 4294901760
    %260 = vmatpush1.msra.mxu0 %v259
    %v261 = vand.u32 %v55, 4294901760
    %v262 = vsub.f32 %v55, %v261
    %v263 = vand.u32 %v262, 4294901760
    %v264 = vsub.f32 %v262, %v263
    %v265 = vand.u32 %v264, 4294901760
    %266 = vmatprep.subr.mxu0 %v265
    %v267 = vand.u32 %v54, 4294901760
    %v268 = vsub.f32 %v54, %v267
    %v269 = vand.u32 %v268, 4294901760
    %v270 = vsub.f32 %v268, %v269
    %v271 = vand.u32 %v270, 4294901760
    %272 = vmatpush1.msra.mxu0 %v271
    %v273 = vand.u32 %v59, 4294901760
    %v274 = vsub.f32 %v59, %v273
    %v275 = vand.u32 %v274, 4294901760
    %v276 = vsub.f32 %v274, %v275
    %v277 = vand.u32 %v276, 4294901760
    %278 = vmatprep.subr.mxu0 %v277
    %v279 = vand.u32 %v58, 4294901760
    %v280 = vsub.f32 %v58, %v279
    %v281 = vand.u32 %v280, 4294901760
    %v282 = vsub.f32 %v280, %v281
    %v283 = vand.u32 %v282, 4294901760
    %284 = vmatpush1.msra.mxu0 %v283
    %v285 = vand.u32 %v63, 4294901760
    %v286 = vsub.f32 %v63, %v285
    %v287 = vand.u32 %v286, 4294901760
    %v288 = vsub.f32 %v286, %v287
    %v289 = vand.u32 %v288, 4294901760
    %290 = vmatprep.subr.mxu0 %v289
    %v291 = vand.u32 %v62, 4294901760
    %v292 = vsub.f32 %v62, %v291
    %v293 = vand.u32 %v292, 4294901760
    %v294 = vsub.f32 %v292, %v293
    %v295 = vand.u32 %v294, 4294901760
    %296 = vmatpush1.msra.mxu0 %v295
    %v297 = vand.u32 %v67, 4294901760
    %v298 = vsub.f32 %v67, %v297
    %v299 = vand.u32 %v298, 4294901760
    %v300 = vsub.f32 %v298, %v299
    %v301 = vand.u32 %v300, 4294901760
    %302 = vmatprep.subr.mxu0 %v301
    %v303 = vand.u32 %v66, 4294901760
    %v304 = vsub.f32 %v66, %v303
    %v305 = vand.u32 %v304, 4294901760
    %v306 = vsub.f32 %v304, %v305
    %v307 = vand.u32 %v306, 4294901760
    %308 = vmatpush1.msra.mxu0 %v307
    %v309 = vand.u32 %v71, 4294901760
    %v310 = vsub.f32 %v71, %v309
    %v311 = vand.u32 %v310, 4294901760
    %v312 = vsub.f32 %v310, %v311
    %v313 = vand.u32 %v312, 4294901760
    %314 = vmatprep.subr.mxu0 %v313
    %v315 = vand.u32 %v70, 4294901760
    %v316 = vsub.f32 %v70, %v315
    %v317 = vand.u32 %v316, 4294901760
    %v318 = vsub.f32 %v316, %v317
    %v319 = vand.u32 %v318, 4294901760
    %320 = vmatpush1.msra.mxu0 %v319
    %v321 = vand.u32 %v75, 4294901760
    %v322 = vsub.f32 %v75, %v321
    %v323 = vand.u32 %v322, 4294901760
    %v324 = vsub.f32 %v322, %v323
    %v325 = vand.u32 %v324, 4294901760
    %326 = vmatprep.subr.mxu0 %v325
    %v327 = vand.u32 %v74, 4294901760
    %v328 = vsub.f32 %v74, %v327
    %v329 = vand.u32 %v328, 4294901760
    %v330 = vsub.f32 %v328, %v329
    %v331 = vand.u32 %v330, 4294901760
    %332 = vmatpush1.msra.mxu0 %v331
    %v333 = vand.u32 %v79, 4294901760
    %v334 = vsub.f32 %v79, %v333
    %v335 = vand.u32 %v334, 4294901760
    %v336 = vsub.f32 %v334, %v335
    %v337 = vand.u32 %v336, 4294901760
    %338 = vmatprep.subr.mxu0 %v337
    %v339 = vand.u32 %v78, 4294901760
    %v340 = vsub.f32 %v78, %v339
    %v341 = vand.u32 %v340, 4294901760
    %v342 = vsub.f32 %v340, %v341
    %v343 = vand.u32 %v342, 4294901760
    %344 = vmatpush1.msra.mxu0 %v343
    %v345 = vand.u32 %v83, 4294901760
    %v346 = vsub.f32 %v83, %v345
    %v347 = vand.u32 %v346, 4294901760
    %v348 = vsub.f32 %v346, %v347
    %v349 = vand.u32 %v348, 4294901760
    %350 = vmatprep.subr.mxu0 %v349
    %v351 = vand.u32 %v82, 4294901760
    %v352 = vsub.f32 %v82, %v351
    %v353 = vand.u32 %v352, 4294901760
    %v354 = vsub.f32 %v352, %v353
    %v355 = vand.u32 %v354, 4294901760
    %356 = vmatpush1.msra.mxu0 %v355
    %v357 = vand.u32 %v87, 4294901760
    %v358 = vsub.f32 %v87, %v357
    %v359 = vand.u32 %v358, 4294901760
    %v360 = vsub.f32 %v358, %v359
    %v361 = vand.u32 %v360, 4294901760
    %362 = vmatprep.subr.mxu0 %v361
    %v363 = vand.u32 %v86, 4294901760
    %v364 = vsub.f32 %v86, %v363
    %v365 = vand.u32 %v364, 4294901760
    %v366 = vsub.f32 %v364, %v365
    %v367 = vand.u32 %v366, 4294901760
    %368 = vmatpush1.msra.mxu0 %v367
    %v369 = vand.u32 %v91, 4294901760
    %v370 = vsub.f32 %v91, %v369
    %v371 = vand.u32 %v370, 4294901760
    %v372 = vsub.f32 %v370, %v371
    %v373 = vand.u32 %v372, 4294901760
    %374 = vmatprep.subr.mxu0 %v373
    %v375 = vand.u32 %v90, 4294901760
    %v376 = vsub.f32 %v90, %v375
    %v377 = vand.u32 %v376, 4294901760
    %v378 = vsub.f32 %v376, %v377
    %v379 = vand.u32 %v378, 4294901760
    %380 = vmatpush1.msra.mxu0 %v379
    %v381 = vand.u32 %v95, 4294901760
    %v382 = vsub.f32 %v95, %v381
    %v383 = vand.u32 %v382, 4294901760
    %v384 = vsub.f32 %v382, %v383
    %v385 = vand.u32 %v384, 4294901760
    %386 = vmatprep.subr.mxu0 %v385
    %v387 = vand.u32 %v94, 4294901760
    %v388 = vsub.f32 %v94, %v387
    %v389 = vand.u32 %v388, 4294901760
    %v390 = vsub.f32 %v388, %v389
    %v391 = vand.u32 %v390, 4294901760
    %392 = vmatpush1.msra.mxu0 %v391
    %v393 = vand.u32 %v99, 4294901760
    %v394 = vsub.f32 %v99, %v393
    %v395 = vand.u32 %v394, 4294901760
    %v396 = vsub.f32 %v394, %v395
    %v397 = vand.u32 %v396, 4294901760
    %398 = vmatprep.subr.mxu0 %v397
    %v399 = vand.u32 %v98, 4294901760
    %v400 = vsub.f32 %v98, %v399
    %v401 = vand.u32 %v400, 4294901760
    %v402 = vsub.f32 %v400, %v401
    %v403 = vand.u32 %v402, 4294901760
    %404 = vmatpush1.msra.mxu0 %v403
    %v405 = vand.u32 %v103, 4294901760
    %v406 = vsub.f32 %v103, %v405
    %v407 = vand.u32 %v406, 4294901760
    %v408 = vsub.f32 %v406, %v407
    %v409 = vand.u32 %v408, 4294901760
    %410 = vmatprep.subr.mxu0 %v409
    %v411 = vand.u32 %v102, 4294901760
    %v412 = vsub.f32 %v102, %v411
    %v413 = vand.u32 %v412, 4294901760
    %v414 = vsub.f32 %v412, %v413
    %v415 = vand.u32 %v414, 4294901760
    %416 = vmatpush1.msra.mxu0 %v415
    %417 = vmatprep.subr.mxu0 0.0
    %418 = vmatpush1.msra.mxu0 0.0
    %419 = vmatprep.subr.mxu0 0.0
    %420 = vmatpush1.msra.mxu0 0.0
    %421 = vmatprep.subr.mxu0 0.0
    %422 = vmatpush1.msra.mxu0 0.0
    %423 = vmatprep.subr.mxu0 0.0
    %424 = vmatpush1.msra.mxu0 0.0
    %425 = vmatprep.subr.mxu0 0.0
    %426 = vmatpush1.msra.mxu0 0.0
    %427 = vmatprep.subr.mxu0 0.0
    %428 = vmatpush1.msra.mxu0 0.0
    %429 = vmatprep.subr.mxu0 0.0
    %430 = vmatpush1.msra.mxu0 0.0
    %431 = vmatprep.subr.mxu0 0.0
    %432 = vmatpush1.msra.mxu0 0.0
    %433 = vmatprep.subr.mxu0 0.0
    %434 = vmatpush1.msra.mxu0 0.0
    %435 = vmatprep.subr.mxu0 0.0
    %436 = vmatpush1.msra.mxu0 0.0
    %437 = vmatprep.subr.mxu0 0.0
    %438 = vmatpush1.msra.mxu0 0.0
    %439 = vmatprep.subr.mxu0 0.0
    %440 = vmatpush1.msra.mxu0 0.0
    %441 = vmatprep.subr.mxu0 0.0
    %442 = vmatpush1.msra.mxu0 0.0
    %443 = vmatprep.subr.mxu0 0.0
    %444 = vmatpush1.msra.mxu0 0.0
    %445 = vmatprep.subr.mxu0 0.0
    %446 = vmatpush1.msra.mxu0 0.0
    %447 = vmatprep.subr.mxu0 0.0
    %448 = vmatpush1.msra.mxu0 0.0
    %449 = vmatprep.mubr.f32.mxu0 0.0
    %v450 = vand.u32 %v40, 4294901760
    %451 = vmatmul.mubr.f32.gmra.mrb[0].mxu0 %v450
    %v452 = vpop.f32.mrb[0].mxu0
    %v453 = vadd.f32 %v210, %v452
    %v454 = vpop.f32.mrb[0].mxu0
    %v455 = vadd.f32 %v212, %v454
    %456 = vmatprep.mubr.f32.mxu0 0.0
    %v457 = vand.u32 %v41, 4294901760
    %458 = vmatmul.mubr.f32.gmra.mrb[0].mxu0 %v457
    %v459 = vpop.f32.mrb[0].mxu0
    %v460 = vadd.f32 %v221, %v459
    %v461 = vpop.f32.mrb[0].mxu0
    %v462 = vadd.f32 %v223, %v461
    %463 = vdwg.mxu0
    %v464 = vand.u32 %v43, 4294901760
    %v465 = vsub.f32 %v43, %v464
    %466 = vmatprep.subr.mxu0 %v465
    %v467 = vand.u32 %v42, 4294901760
    %v468 = vsub.f32 %v42, %v467
    %469 = vmatpush1.msra.mxu0 %v468
    %v470 = vand.u32 %v47, 4294901760
    %v471 = vsub.f32 %v47, %v470
    %472 = vmatprep.subr.mxu0 %v471
    %v473 = vand.u32 %v46, 4294901760
    %v474 = vsub.f32 %v46, %v473
    %475 = vmatpush1.msra.mxu0 %v474
    %v476 = vand.u32 %v51, 4294901760
    %v477 = vsub.f32 %v51, %v476
    %478 = vmatprep.subr.mxu0 %v477
    %v479 = vand.u32 %v50, 4294901760
    %v480 = vsub.f32 %v50, %v479
    %481 = vmatpush1.msra.mxu0 %v480
    %v482 = vand.u32 %v55, 4294901760
    %v483 = vsub.f32 %v55, %v482
    %484 = vmatprep.subr.mxu0 %v483
    %v485 = vand.u32 %v54, 4294901760
    %v486 = vsub.f32 %v54, %v485
    %487 = vmatpush1.msra.mxu0 %v486
    %v488 = vand.u32 %v59, 4294901760
    %v489 = vsub.f32 %v59, %v488
    %490 = vmatprep.subr.mxu0 %v489
    %v491 = vand.u32 %v58, 4294901760
    %v492 = vsub.f32 %v58, %v491
    %493 = vmatpush1.msra.mxu0 %v492
    %v494 = vand.u32 %v63, 4294901760
    %v495 = vsub.f32 %v63, %v494
    %496 = vmatprep.subr.mxu0 %v495
    %v497 = vand.u32 %v62, 4294901760
    %v498 = vsub.f32 %v62, %v497
    %499 = vmatpush1.msra.mxu0 %v498
    %v500 = vand.u32 %v67, 4294901760
    %v501 = vsub.f32 %v67, %v500
    %502 = vmatprep.subr.mxu0 %v501
    %v503 = vand.u32 %v66, 4294901760
    %v504 = vsub.f32 %v66, %v503
    %505 = vmatpush1.msra.mxu0 %v504
    %v506 = vand.u32 %v71, 4294901760
    %v507 = vsub.f32 %v71, %v506
    %508 = vmatprep.subr.mxu0 %v507
    %v509 = vand.u32 %v70, 4294901760
    %v510 = vsub.f32 %v70, %v509
    %511 = vmatpush1.msra.mxu0 %v510
    %v512 = vand.u32 %v75, 4294901760
    %v513 = vsub.f32 %v75, %v512
    %514 = vmatprep.subr.mxu0 %v513
    %v515 = vand.u32 %v74, 4294901760
    %v516 = vsub.f32 %v74, %v515
    %517 = vmatpush1.msra.mxu0 %v516
    %v518 = vand.u32 %v79, 4294901760
    %v519 = vsub.f32 %v79, %v518
    %520 = vmatprep.subr.mxu0 %v519
    %v521 = vand.u32 %v78, 4294901760
    %v522 = vsub.f32 %v78, %v521
    %523 = vmatpush1.msra.mxu0 %v522
    %v524 = vand.u32 %v83, 4294901760
    %v525 = vsub.f32 %v83, %v524
    %526 = vmatprep.subr.mxu0 %v525
    %v527 = vand.u32 %v82, 4294901760
    %v528 = vsub.f32 %v82, %v527
    %529 = vmatpush1.msra.mxu0 %v528
    %v530 = vand.u32 %v87, 4294901760
    %v531 = vsub.f32 %v87, %v530
    %532 = vmatprep.subr.mxu0 %v531
    %v533 = vand.u32 %v86, 4294901760
    %v534 = vsub.f32 %v86, %v533
    %535 = vmatpush1.msra.mxu0 %v534
    %v536 = vand.u32 %v91, 4294901760
    %v537 = vsub.f32 %v91, %v536
    %538 = vmatprep.subr.mxu0 %v537
    %v539 = vand.u32 %v90, 4294901760
    %v540 = vsub.f32 %v90, %v539
    %541 = vmatpush1.msra.mxu0 %v540
    %v542 = vand.u32 %v95, 4294901760
    %v543 = vsub.f32 %v95, %v542
    %544 = vmatprep.subr.mxu0 %v543
    %v545 = vand.u32 %v94, 4294901760
    %v546 = vsub.f32 %v94, %v545
    %547 = vmatpush1.msra.mxu0 %v546
    %v548 = vand.u32 %v99, 4294901760
    %v549 = vsub.f32 %v99, %v548
    %550 = vmatprep.subr.mxu0 %v549
    %v551 = vand.u32 %v98, 4294901760
    %v552 = vsub.f32 %v98, %v551
    %553 = vmatpush1.msra.mxu0 %v552
    %v554 = vand.u32 %v103, 4294901760
    %v555 = vsub.f32 %v103, %v554
    %556 = vmatprep.subr.mxu0 %v555
    %v557 = vand.u32 %v102, 4294901760
    %v558 = vsub.f32 %v102, %v557
    %559 = vmatpush1.msra.mxu0 %v558
    %560 = vmatprep.subr.mxu0 0.0
    %561 = vmatpush1.msra.mxu0 0.0
    %562 = vmatprep.subr.mxu0 0.0
    %563 = vmatpush1.msra.mxu0 0.0
    %564 = vmatprep.subr.mxu0 0.0
    %565 = vmatpush1.msra.mxu0 0.0
    %566 = vmatprep.subr.mxu0 0.0
    %567 = vmatpush1.msra.mxu0 0.0
    %568 = vmatprep.subr.mxu0 0.0
    %569 = vmatpush1.msra.mxu0 0.0
    %570 = vmatprep.subr.mxu0 0.0
    %571 = vmatpush1.msra.mxu0 0.0
    %572 = vmatprep.subr.mxu0 0.0
    %573 = vmatpush1.msra.mxu0 0.0
    %574 = vmatprep.subr.mxu0 0.0
    %575 = vmatpush1.msra.mxu0 0.0
    %576 = vmatprep.subr.mxu0 0.0
    %577 = vmatpush1.msra.mxu0 0.0
    %578 = vmatprep.subr.mxu0 0.0
    %579 = vmatpush1.msra.mxu0 0.0
    %580 = vmatprep.subr.mxu0 0.0
    %581 = vmatpush1.msra.mxu0 0.0
    %582 = vmatprep.subr.mxu0 0.0
    %583 = vmatpush1.msra.mxu0 0.0
    %584 = vmatprep.subr.mxu0 0.0
    %585 = vmatpush1.msra.mxu0 0.0
    %586 = vmatprep.subr.mxu0 0.0
    %587 = vmatpush1.msra.mxu0 0.0
    %588 = vmatprep.subr.mxu0 0.0
    %589 = vmatpush1.msra.mxu0 0.0
    %590 = vmatprep.subr.mxu0 0.0
    %591 = vmatpush1.msra.mxu0 0.0
    %592 = vmatprep.mubr.f32.mxu0 0.0
    %v593 = vand.u32 %v40, 4294901760
    %v594 = vsub.f32 %v40, %v593
    %595 = vmatmul.mubr.f32.gmra.mrb[0].mxu0 %v594
    %v596 = vpop.f32.mrb[0].mxu0
    %v597 = vadd.f32 %v453, %v596
    %v598 = vpop.f32.mrb[0].mxu0
    %v599 = vadd.f32 %v455, %v598
    %600 = vmatprep.mubr.f32.mxu0 0.0
    %v601 = vand.u32 %v41, 4294901760
    %v602 = vsub.f32 %v41, %v601
    %603 = vmatmul.mubr.f32.gmra.mrb[0].mxu0 %v602
    %v604 = vpop.f32.mrb[0].mxu0
    %v605 = vadd.f32 %v460, %v604
    %v606 = vpop.f32.mrb[0].mxu0
    %v607 = vadd.f32 %v462, %v606
    %608 = vdwg.mxu0
    %v609 = vand.u32 %v43, 4294901760
    %610 = vmatprep.subr.mxu0 %v609
    %v611 = vand.u32 %v42, 4294901760
    %612 = vmatpush1.msra.mxu0 %v611
    %v613 = vand.u32 %v47, 4294901760
    %614 = vmatprep.subr.mxu0 %v613
    %v615 = vand.u32 %v46, 4294901760
    %616 = vmatpush1.msra.mxu0 %v615
    %v617 = vand.u32 %v51, 4294901760
    %618 = vmatprep.subr.mxu0 %v617
    %v619 = vand.u32 %v50, 4294901760
    %620 = vmatpush1.msra.mxu0 %v619
    %v621 = vand.u32 %v55, 4294901760
    %622 = vmatprep.subr.mxu0 %v621
    %v623 = vand.u32 %v54, 4294901760
    %624 = vmatpush1.msra.mxu0 %v623
    %v625 = vand.u32 %v59, 4294901760
    %626 = vmatprep.subr.mxu0 %v625
    %v627 = vand.u32 %v58, 4294901760
    %628 = vmatpush1.msra.mxu0 %v627
    %v629 = vand.u32 %v63, 4294901760
    %630 = vmatprep.subr.mxu0 %v629
    %v631 = vand.u32 %v62, 4294901760
    %632 = vmatpush1.msra.mxu0 %v631
    %v633 = vand.u32 %v67, 4294901760
    %634 = vmatprep.subr.mxu0 %v633
    %v635 = vand.u32 %v66, 4294901760
    %636 = vmatpush1.msra.mxu0 %v635
    %v637 = vand.u32 %v71, 4294901760
    %638 = vmatprep.subr.mxu0 %v637
    %v639 = vand.u32 %v70, 4294901760
    %640 = vmatpush1.msra.mxu0 %v639
    %v641 = vand.u32 %v75, 4294901760
    %642 = vmatprep.subr.mxu0 %v641
    %v643 = vand.u32 %v74, 4294901760
    %644 = vmatpush1.msra.mxu0 %v643
    %v645 = vand.u32 %v79, 4294901760
    %646 = vmatprep.subr.mxu0 %v645
    %v647 = vand.u32 %v78, 4294901760
    %648 = vmatpush1.msra.mxu0 %v647
    %v649 = vand.u32 %v83, 4294901760
    %650 = vmatprep.subr.mxu0 %v649
    %v651 = vand.u32 %v82, 4294901760
    %652 = vmatpush1.msra.mxu0 %v651
    %v653 = vand.u32 %v87, 4294901760
    %654 = vmatprep.subr.mxu0 %v653
    %v655 = vand.u32 %v86, 4294901760
    %656 = vmatpush1.msra.mxu0 %v655
    %v657 = vand.u32 %v91, 4294901760
    %658 = vmatprep.subr.mxu0 %v657
    %v659 = vand.u32 %v90, 4294901760
    %660 = vmatpush1.msra.mxu0 %v659
    %v661 = vand.u32 %v95, 4294901760
    %662 = vmatprep.subr.mxu0 %v661
    %v663 = vand.u32 %v94, 4294901760
    %664 = vmatpush1.msra.mxu0 %v663
    %v665 = vand.u32 %v99, 4294901760
    %666 = vmatprep.subr.mxu0 %v665
    %v667 = vand.u32 %v98, 4294901760
    %668 = vmatpush1.msra.mxu0 %v667
    %v669 = vand.u32 %v103, 4294901760
    %670 = vmatprep.subr.mxu0 %v669
    %v671 = vand.u32 %v102, 4294901760
    %672 = vmatpush1.msra.mxu0 %v671
    %673 = vmatprep.subr.mxu0 0.0
    %674 = vmatpush1.msra.mxu0 0.0
    %675 = vmatprep.subr.mxu0 0.0
    %676 = vmatpush1.msra.mxu0 0.0
    %677 = vmatprep.subr.mxu0 0.0
    %678 = vmatpush1.msra.mxu0 0.0
    %679 = vmatprep.subr.mxu0 0.0
    %680 = vmatpush1.msra.mxu0 0.0
    %681 = vmatprep.subr.mxu0 0.0
    %682 = vmatpush1.msra.mxu0 0.0
    %683 = vmatprep.subr.mxu0 0.0
    %684 = vmatpush1.msra.mxu0 0.0
    %685 = vmatprep.subr.mxu0 0.0
    %686 = vmatpush1.msra.mxu0 0.0
    %687 = vmatprep.subr.mxu0 0.0
    %688 = vmatpush1.msra.mxu0 0.0
    %689 = vmatprep.subr.mxu0 0.0
    %690 = vmatpush1.msra.mxu0 0.0
    %691 = vmatprep.subr.mxu0 0.0
    %692 = vmatpush1.msra.mxu0 0.0
    %693 = vmatprep.subr.mxu0 0.0
    %694 = vmatpush1.msra.mxu0 0.0
    %695 = vmatprep.subr.mxu0 0.0
    %696 = vmatpush1.msra.mxu0 0.0
    %697 = vmatprep.subr.mxu0 0.0
    %698 = vmatpush1.msra.mxu0 0.0
    %699 = vmatprep.subr.mxu0 0.0
    %700 = vmatpush1.msra.mxu0 0.0
    %701 = vmatprep.subr.mxu0 0.0
    %702 = vmatpush1.msra.mxu0 0.0
    %703 = vmatprep.subr.mxu0 0.0
    %704 = vmatpush1.msra.mxu0 0.0
    %705 = vmatprep.mubr.f32.mxu0 0.0
    %v706 = vand.u32 %v40, 4294901760
    %v707 = vsub.f32 %v40, %v706
    %v708 = vand.u32 %v707, 4294901760
    %709 = vmatmul.mubr.f32.gmra.mrb[0].mxu0 %v708
    %v710 = vpop.f32.mrb[0].mxu0
    %v711 = vadd.f32 %v597, %v710
    %v712 = vpop.f32.mrb[0].mxu0
    %v713 = vadd.f32 %v599, %v712
    %714 = vmatprep.mubr.f32.mxu0 0.0
    %v715 = vand.u32 %v41, 4294901760
    %v716 = vsub.f32 %v41, %v715
    %v717 = vand.u32 %v716, 4294901760
    %718 = vmatmul.mubr.f32.gmra.mrb[0].mxu0 %v717
    %v719 = vpop.f32.mrb[0].mxu0
    %v720 = vadd.f32 %v605, %v719
    %v721 = vpop.f32.mrb[0].mxu0
    %v722 = vadd.f32 %v607, %v721
    %723 = vdwg.mxu0
    %v724 = vand.u32 %v43, 4294901760
    %v725 = vsub.f32 %v43, %v724
    %v726 = vand.u32 %v725, 4294901760
    %727 = vmatprep.subr.mxu0 %v726
    %v728 = vand.u32 %v42, 4294901760
    %v729 = vsub.f32 %v42, %v728
    %v730 = vand.u32 %v729, 4294901760
    %731 = vmatpush1.msra.mxu0 %v730
    %v732 = vand.u32 %v47, 4294901760
    %v733 = vsub.f32 %v47, %v732
    %v734 = vand.u32 %v733, 4294901760
    %735 = vmatprep.subr.mxu0 %v734
    %v736 = vand.u32 %v46, 4294901760
    %v737 = vsub.f32 %v46, %v736
    %v738 = vand.u32 %v737, 4294901760
    %739 = vmatpush1.msra.mxu0 %v738
    %v740 = vand.u32 %v51, 4294901760
    %v741 = vsub.f32 %v51, %v740
    %v742 = vand.u32 %v741, 4294901760
    %743 = vmatprep.subr.mxu0 %v742
    %v744 = vand.u32 %v50, 4294901760
    %v745 = vsub.f32 %v50, %v744
    %v746 = vand.u32 %v745, 4294901760
    %747 = vmatpush1.msra.mxu0 %v746
    %v748 = vand.u32 %v55, 4294901760
    %v749 = vsub.f32 %v55, %v748
    %v750 = vand.u32 %v749, 4294901760
    %751 = vmatprep.subr.mxu0 %v750
    %v752 = vand.u32 %v54, 4294901760
    %v753 = vsub.f32 %v54, %v752
    %v754 = vand.u32 %v753, 4294901760
    %755 = vmatpush1.msra.mxu0 %v754
    %v756 = vand.u32 %v59, 4294901760
    %v757 = vsub.f32 %v59, %v756
    %v758 = vand.u32 %v757, 4294901760
    %759 = vmatprep.subr.mxu0 %v758
    %v760 = vand.u32 %v58, 4294901760
    %v761 = vsub.f32 %v58, %v760
    %v762 = vand.u32 %v761, 4294901760
    %763 = vmatpush1.msra.mxu0 %v762
    %v764 = vand.u32 %v63, 4294901760
    %v765 = vsub.f32 %v63, %v764
    %v766 = vand.u32 %v765, 4294901760
    %767 = vmatprep.subr.mxu0 %v766
    %v768 = vand.u32 %v62, 4294901760
    %v769 = vsub.f32 %v62, %v768
    %v770 = vand.u32 %v769, 4294901760
    %771 = vmatpush1.msra.mxu0 %v770
    %v772 = vand.u32 %v67, 4294901760
    %v773 = vsub.f32 %v67, %v772
    %v774 = vand.u32 %v773, 4294901760
    %775 = vmatprep.subr.mxu0 %v774
    %v776 = vand.u32 %v66, 4294901760
    %v777 = vsub.f32 %v66, %v776
    %v778 = vand.u32 %v777, 4294901760
    %779 = vmatpush1.msra.mxu0 %v778
    %v780 = vand.u32 %v71, 4294901760
    %v781 = vsub.f32 %v71, %v780
    %v782 = vand.u32 %v781, 4294901760
    %783 = vmatprep.subr.mxu0 %v782
    %v784 = vand.u32 %v70, 4294901760
    %v785 = vsub.f32 %v70, %v784
    %v786 = vand.u32 %v785, 4294901760
    %787 = vmatpush1.msra.mxu0 %v786
    %v788 = vand.u32 %v75, 4294901760
    %v789 = vsub.f32 %v75, %v788
    %v790 = vand.u32 %v789, 4294901760
    %791 = vmatprep.subr.mxu0 %v790
    %v792 = vand.u32 %v74, 4294901760
    %v793 = vsub.f32 %v74, %v792
    %v794 = vand.u32 %v793, 4294901760
    %795 = vmatpush1.msra.mxu0 %v794
    %v796 = vand.u32 %v79, 4294901760
    %v797 = vsub.f32 %v79, %v796
    %v798 = vand.u32 %v797, 4294901760
    %799 = vmatprep.subr.mxu0 %v798
    %v800 = vand.u32 %v78, 4294901760
    %v801 = vsub.f32 %v78, %v800
    %v802 = vand.u32 %v801, 4294901760
    %803 = vmatpush1.msra.mxu0 %v802
    %v804 = vand.u32 %v83, 4294901760
    %v805 = vsub.f32 %v83, %v804
    %v806 = vand.u32 %v805, 4294901760
    %807 = vmatprep.subr.mxu0 %v806
    %v808 = vand.u32 %v82, 4294901760
    %v809 = vsub.f32 %v82, %v808
    %v810 = vand.u32 %v809, 4294901760
    %811 = vmatpush1.msra.mxu0 %v810
    %v812 = vand.u32 %v87, 4294901760
    %v813 = vsub.f32 %v87, %v812
    %v814 = vand.u32 %v813, 4294901760
    %815 = vmatprep.subr.mxu0 %v814
    %v816 = vand.u32 %v86, 4294901760
    %v817 = vsub.f32 %v86, %v816
    %v818 = vand.u32 %v817, 4294901760
    %819 = vmatpush1.msra.mxu0 %v818
    %v820 = vand.u32 %v91, 4294901760
    %v821 = vsub.f32 %v91, %v820
    %v822 = vand.u32 %v821, 4294901760
    %823 = vmatprep.subr.mxu0 %v822
    %v824 = vand.u32 %v90, 4294901760
    %v825 = vsub.f32 %v90, %v824
    %v826 = vand.u32 %v825, 4294901760
    %827 = vmatpush1.msra.mxu0 %v826
    %v828 = vand.u32 %v95, 4294901760
    %v829 = vsub.f32 %v95, %v828
    %v830 = vand.u32 %v829, 4294901760
    %831 = vmatprep.subr.mxu0 %v830
    %v832 = vand.u32 %v94, 4294901760
    %v833 = vsub.f32 %v94, %v832
    %v834 = vand.u32 %v833, 4294901760
    %835 = vmatpush1.msra.mxu0 %v834
    %v836 = vand.u32 %v99, 4294901760
    %v837 = vsub.f32 %v99, %v836
    %v838 = vand.u32 %v837, 4294901760
    %839 = vmatprep.subr.mxu0 %v838
    %v840 = vand.u32 %v98, 4294901760
    %v841 = vsub.f32 %v98, %v840
    %v842 = vand.u32 %v841, 4294901760
    %843 = vmatpush1.msra.mxu0 %v842
    %v844 = vand.u32 %v103, 4294901760
    %v845 = vsub.f32 %v103, %v844
    %v846 = vand.u32 %v845, 4294901760
    %847 = vmatprep.subr.mxu0 %v846
    %v848 = vand.u32 %v102, 4294901760
    %v849 = vsub.f32 %v102, %v848
    %v850 = vand.u32 %v849, 4294901760
    %851 = vmatpush1.msra.mxu0 %v850
    %852 = vmatprep.subr.mxu0 0.0
    %853 = vmatpush1.msra.mxu0 0.0
    %854 = vmatprep.subr.mxu0 0.0
    %855 = vmatpush1.msra.mxu0 0.0
    %856 = vmatprep.subr.mxu0 0.0
    %857 = vmatpush1.msra.mxu0 0.0
    %858 = vmatprep.subr.mxu0 0.0
    %859 = vmatpush1.msra.mxu0 0.0
    %860 = vmatprep.subr.mxu0 0.0
    %861 = vmatpush1.msra.mxu0 0.0
    %862 = vmatprep.subr.mxu0 0.0
    %863 = vmatpush1.msra.mxu0 0.0
    %864 = vmatprep.subr.mxu0 0.0
    %865 = vmatpush1.msra.mxu0 0.0
    %866 = vmatprep.subr.mxu0 0.0
    %867 = vmatpush1.msra.mxu0 0.0
    %868 = vmatprep.subr.mxu0 0.0
    %869 = vmatpush1.msra.mxu0 0.0
    %870 = vmatprep.subr.mxu0 0.0
    %871 = vmatpush1.msra.mxu0 0.0
    %872 = vmatprep.subr.mxu0 0.0
    %873 = vmatpush1.msra.mxu0 0.0
    %874 = vmatprep.subr.mxu0 0.0
    %875 = vmatpush1.msra.mxu0 0.0
    %876 = vmatprep.subr.mxu0 0.0
    %877 = vmatpush1.msra.mxu0 0.0
    %878 = vmatprep.subr.mxu0 0.0
    %879 = vmatpush1.msra.mxu0 0.0
    %880 = vmatprep.subr.mxu0 0.0
    %881 = vmatpush1.msra.mxu0 0.0
    %882 = vmatprep.subr.mxu0 0.0
    %883 = vmatpush1.msra.mxu0 0.0
    %884 = vmatprep.mubr.f32.mxu0 0.0
    %v885 = vand.u32 %v40, 4294901760
    %886 = vmatmul.mubr.f32.gmra.mrb[0].mxu0 %v885
    %v887 = vpop.f32.mrb[0].mxu0
    %v888 = vadd.f32 %v711, %v887
    %v889 = vpop.f32.mrb[0].mxu0
    %v890 = vadd.f32 %v713, %v889
    %891 = vmatprep.mubr.f32.mxu0 0.0
    %v892 = vand.u32 %v41, 4294901760
    %893 = vmatmul.mubr.f32.gmra.mrb[0].mxu0 %v892
    %v894 = vpop.f32.mrb[0].mxu0
    %v895 = vadd.f32 %v720, %v894
    %v896 = vpop.f32.mrb[0].mxu0
    %v897 = vadd.f32 %v722, %v896
    %898 = vdwg.mxu0
    %v899 = vand.u32 %v43, 4294901760
    %900 = vmatprep.subr.mxu0 %v899
    %v901 = vand.u32 %v42, 4294901760
    %902 = vmatpush1.msra.mxu0 %v901
    %v903 = vand.u32 %v47, 4294901760
    %904 = vmatprep.subr.mxu0 %v903
    %v905 = vand.u32 %v46, 4294901760
    %906 = vmatpush1.msra.mxu0 %v905
    %v907 = vand.u32 %v51, 4294901760
    %908 = vmatprep.subr.mxu0 %v907
    %v909 = vand.u32 %v50, 4294901760
    %910 = vmatpush1.msra.mxu0 %v909
    %v911 = vand.u32 %v55, 4294901760
    %912 = vmatprep.subr.mxu0 %v911
    %v913 = vand.u32 %v54, 4294901760
    %914 = vmatpush1.msra.mxu0 %v913
    %v915 = vand.u32 %v59, 4294901760
    %916 = vmatprep.subr.mxu0 %v915
    %v917 = vand.u32 %v58, 4294901760
    %918 = vmatpush1.msra.mxu0 %v917
    %v919 = vand.u32 %v63, 4294901760
    %920 = vmatprep.subr.mxu0 %v919
    %v921 = vand.u32 %v62, 4294901760
    %922 = vmatpush1.msra.mxu0 %v921
    %v923 = vand.u32 %v67, 4294901760
    %924 = vmatprep.subr.mxu0 %v923
    %v925 = vand.u32 %v66, 4294901760
    %926 = vmatpush1.msra.mxu0 %v925
    %v927 = vand.u32 %v71, 4294901760
    %928 = vmatprep.subr.mxu0 %v927
    %v929 = vand.u32 %v70, 4294901760
    %930 = vmatpush1.msra.mxu0 %v929
    %v931 = vand.u32 %v75, 4294901760
    %932 = vmatprep.subr.mxu0 %v931
    %v933 = vand.u32 %v74, 4294901760
    %934 = vmatpush1.msra.mxu0 %v933
    %v935 = vand.u32 %v79, 4294901760
    %936 = vmatprep.subr.mxu0 %v935
    %v937 = vand.u32 %v78, 4294901760
    %938 = vmatpush1.msra.mxu0 %v937
    %v939 = vand.u32 %v83, 4294901760
    %940 = vmatprep.subr.mxu0 %v939
    %v941 = vand.u32 %v82, 4294901760
    %942 = vmatpush1.msra.mxu0 %v941
    %v943 = vand.u32 %v87, 4294901760
    %944 = vmatprep.subr.mxu0 %v943
    %v945 = vand.u32 %v86, 4294901760
    %946 = vmatpush1.msra.mxu0 %v945
    %v947 = vand.u32 %v91, 4294901760
    %948 = vmatprep.subr.mxu0 %v947
    %v949 = vand.u32 %v90, 4294901760
    %950 = vmatpush1.msra.mxu0 %v949
    %v951 = vand.u32 %v95, 4294901760
    %952 = vmatprep.subr.mxu0 %v951
    %v953 = vand.u32 %v94, 4294901760
    %954 = vmatpush1.msra.mxu0 %v953
    %v955 = vand.u32 %v99, 4294901760
    %956 = vmatprep.subr.mxu0 %v955
    %v957 = vand.u32 %v98, 4294901760
    %958 = vmatpush1.msra.mxu0 %v957
    %v959 = vand.u32 %v103, 4294901760
    %960 = vmatprep.subr.mxu0 %v959
    %v961 = vand.u32 %v102, 4294901760
    %962 = vmatpush1.msra.mxu0 %v961
    %963 = vmatprep.subr.mxu0 0.0
    %964 = vmatpush1.msra.mxu0 0.0
    %965 = vmatprep.subr.mxu0 0.0
    %966 = vmatpush1.msra.mxu0 0.0
    %967 = vmatprep.subr.mxu0 0.0
    %968 = vmatpush1.msra.mxu0 0.0
    %969 = vmatprep.subr.mxu0 0.0
    %970 = vmatpush1.msra.mxu0 0.0
    %971 = vmatprep.subr.mxu0 0.0
    %972 = vmatpush1.msra.mxu0 0.0
    %973 = vmatprep.subr.mxu0 0.0
    %974 = vmatpush1.msra.mxu0 0.0
    %975 = vmatprep.subr.mxu0 0.0
    %976 = vmatpush1.msra.mxu0 0.0
    %977 = vmatprep.subr.mxu0 0.0
    %978 = vmatpush1.msra.mxu0 0.0
    %979 = vmatprep.subr.mxu0 0.0
    %980 = vmatpush1.msra.mxu0 0.0
    %981 = vmatprep.subr.mxu0 0.0
    %982 = vmatpush1.msra.mxu0 0.0
    %983 = vmatprep.subr.mxu0 0.0
    %984 = vmatpush1.msra.mxu0 0.0
    %985 = vmatprep.subr.mxu0 0.0
    %986 = vmatpush1.msra.mxu0 0.0
    %987 = vmatprep.subr.mxu0 0.0
    %988 = vmatpush1.msra.mxu0 0.0
    %989 = vmatprep.subr.mxu0 0.0
    %990 = vmatpush1.msra.mxu0 0.0
    %991 = vmatprep.subr.mxu0 0.0
    %992 = vmatpush1.msra.mxu0 0.0
    %993 = vmatprep.subr.mxu0 0.0
    %994 = vmatpush1.msra.mxu0 0.0
    %995 = vmatprep.mubr.f32.mxu0 0.0
    %v996 = vand.u32 %v40, 4294901760
    %997 = vmatmul.mubr.f32.gmra.mrb[0].mxu0 %v996
    %v998 = vpop.f32.mrb[0].mxu0
    %v999 = vadd.f32 %v888, %v998
    %v1000 = vpop.f32.mrb[0].mxu0
    %v1001 = vadd.f32 %v890, %v1000
    %1002 = vmatprep.mubr.f32.mxu0 0.0
    %v1003 = vand.u32 %v41, 4294901760
    %1004 = vmatmul.mubr.f32.gmra.mrb[0].mxu0 %v1003
    %v1005 = vpop.f32.mrb[0].mxu0
    %v1006 = vadd.f32 %v895, %v1005
    %v1007 = vpop.f32.mrb[0].mxu0
    %v1008 = vadd.f32 %v897, %v1007
    %1009 = vdwg.mxu0
    %v1010 = vand.u32 %v45, 4294901760
    %1011 = vmatprep.subr.mxu0 %v1010
    %v1012 = vand.u32 %v44, 4294901760
    %1013 = vmatpush1.msra.mxu0 %v1012
    %v1014 = vand.u32 %v49, 4294901760
    %1015 = vmatprep.subr.mxu0 %v1014
    %v1016 = vand.u32 %v48, 4294901760
    %1017 = vmatpush1.msra.mxu0 %v1016
    %v1018 = vand.u32 %v53, 4294901760
    %1019 = vmatprep.subr.mxu0 %v1018
    %v1020 = vand.u32 %v52, 4294901760
    %1021 = vmatpush1.msra.mxu0 %v1020
    %v1022 = vand.u32 %v57, 4294901760
    %1023 = vmatprep.subr.mxu0 %v1022
    %v1024 = vand.u32 %v56, 4294901760
    %1025 = vmatpush1.msra.mxu0 %v1024
    %v1026 = vand.u32 %v61, 4294901760
    %1027 = vmatprep.subr.mxu0 %v1026
    %v1028 = vand.u32 %v60, 4294901760
    %1029 = vmatpush1.msra.mxu0 %v1028
    %v1030 = vand.u32 %v65, 4294901760
    %1031 = vmatprep.subr.mxu0 %v1030
    %v1032 = vand.u32 %v64, 4294901760
    %1033 = vmatpush1.msra.mxu0 %v1032
    %v1034 = vand.u32 %v69, 4294901760
    %1035 = vmatprep.subr.mxu0 %v1034
    %v1036 = vand.u32 %v68, 4294901760
    %1037 = vmatpush1.msra.mxu0 %v1036
    %v1038 = vand.u32 %v73, 4294901760
    %1039 = vmatprep.subr.mxu0 %v1038
    %v1040 = vand.u32 %v72, 4294901760
    %1041 = vmatpush1.msra.mxu0 %v1040
    %v1042 = vand.u32 %v77, 4294901760
    %1043 = vmatprep.subr.mxu0 %v1042
    %v1044 = vand.u32 %v76, 4294901760
    %1045 = vmatpush1.msra.mxu0 %v1044
    %v1046 = vand.u32 %v81, 4294901760
    %1047 = vmatprep.subr.mxu0 %v1046
    %v1048 = vand.u32 %v80, 4294901760
    %1049 = vmatpush1.msra.mxu0 %v1048
    %v1050 = vand.u32 %v85, 4294901760
    %1051 = vmatprep.subr.mxu0 %v1050
    %v1052 = vand.u32 %v84, 4294901760
    %1053 = vmatpush1.msra.mxu0 %v1052
    %v1054 = vand.u32 %v89, 4294901760
    %1055 = vmatprep.subr.mxu0 %v1054
    %v1056 = vand.u32 %v88, 4294901760
    %1057 = vmatpush1.msra.mxu0 %v1056
    %v1058 = vand.u32 %v93, 4294901760
    %1059 = vmatprep.subr.mxu0 %v1058
    %v1060 = vand.u32 %v92, 4294901760
    %1061 = vmatpush1.msra.mxu0 %v1060
    %v1062 = vand.u32 %v97, 4294901760
    %1063 = vmatprep.subr.mxu0 %v1062
    %v1064 = vand.u32 %v96, 4294901760
    %1065 = vmatpush1.msra.mxu0 %v1064
    %v1066 = vand.u32 %v101, 4294901760
    %1067 = vmatprep.subr.mxu0 %v1066
    %v1068 = vand.u32 %v100, 4294901760
    %1069 = vmatpush1.msra.mxu0 %v1068
    %v1070 = vand.u32 %v105, 4294901760
    %1071 = vmatprep.subr.mxu0 %v1070
    %v1072 = vand.u32 %v104, 4294901760
    %1073 = vmatpush1.msra.mxu0 %v1072
    %1074 = vmatprep.subr.mxu0 0.0
    %1075 = vmatpush1.msra.mxu0 0.0
    %1076 = vmatprep.subr.mxu0 0.0
    %1077 = vmatpush1.msra.mxu0 0.0
    %1078 = vmatprep.subr.mxu0 0.0
    %1079 = vmatpush1.msra.mxu0 0.0
    %1080 = vmatprep.subr.mxu0 0.0
    %1081 = vmatpush1.msra.mxu0 0.0
    %1082 = vmatprep.subr.mxu0 0.0
    %1083 = vmatpush1.msra.mxu0 0.0
    %1084 = vmatprep.subr.mxu0 0.0
    %1085 = vmatpush1.msra.mxu0 0.0
    %1086 = vmatprep.subr.mxu0 0.0
    %1087 = vmatpush1.msra.mxu0 0.0
    %1088 = vmatprep.subr.mxu0 0.0
    %1089 = vmatpush1.msra.mxu0 0.0
    %1090 = vmatprep.subr.mxu0 0.0
    %1091 = vmatpush1.msra.mxu0 0.0
    %1092 = vmatprep.subr.mxu0 0.0
    %1093 = vmatpush1.msra.mxu0 0.0
    %1094 = vmatprep.subr.mxu0 0.0
    %1095 = vmatpush1.msra.mxu0 0.0
    %1096 = vmatprep.subr.mxu0 0.0
    %1097 = vmatpush1.msra.mxu0 0.0
    %1098 = vmatprep.subr.mxu0 0.0
    %1099 = vmatpush1.msra.mxu0 0.0
    %1100 = vmatprep.subr.mxu0 0.0
    %1101 = vmatpush1.msra.mxu0 0.0
    %1102 = vmatprep.subr.mxu0 0.0
    %1103 = vmatpush1.msra.mxu0 0.0
    %1104 = vmatprep.subr.mxu0 0.0
    %1105 = vmatpush1.msra.mxu0 0.0
    %1106 = vmatprep.mubr.f32.mxu0 0.0
    %v1107 = vand.u32 %v40, 4294901760
    %v1108 = vsub.f32 %v40, %v1107
    %v1109 = vand.u32 %v1108, 4294901760
    %v1110 = vsub.f32 %v1108, %v1109
    %v1111 = vand.u32 %v1110, 4294901760
    %1112 = vmatmul.mubr.f32.gmra.mrb[0].mxu0 %v1111
    %v1113 = vpop.f32.mrb[0].mxu0
    %v1114 = vadd.f32 0.0, %v1113
    %v1115 = vpop.f32.mrb[0].mxu0
    %v1116 = vadd.f32 0.0, %v1115
    %1117 = vmatprep.mubr.f32.mxu0 0.0
    %v1118 = vand.u32 %v41, 4294901760
    %v1119 = vsub.f32 %v41, %v1118
    %v1120 = vand.u32 %v1119, 4294901760
    %v1121 = vsub.f32 %v1119, %v1120
    %v1122 = vand.u32 %v1121, 4294901760
    %1123 = vmatmul.mubr.f32.gmra.mrb[0].mxu0 %v1122
    %v1124 = vpop.f32.mrb[0].mxu0
    %v1125 = vadd.f32 0.0, %v1124
    %v1126 = vpop.f32.mrb[0].mxu0
    %v1127 = vadd.f32 0.0, %v1126
    %1128 = vdwg.mxu0
    %v1129 = vand.u32 %v45, 4294901760
    %v1130 = vsub.f32 %v45, %v1129
    %v1131 = vand.u32 %v1130, 4294901760
    %v1132 = vsub.f32 %v1130, %v1131
    %v1133 = vand.u32 %v1132, 4294901760
    %1134 = vmatprep.subr.mxu0 %v1133
    %v1135 = vand.u32 %v44, 4294901760
    %v1136 = vsub.f32 %v44, %v1135
    %v1137 = vand.u32 %v1136, 4294901760
    %v1138 = vsub.f32 %v1136, %v1137
    %v1139 = vand.u32 %v1138, 4294901760
    %1140 = vmatpush1.msra.mxu0 %v1139
    %v1141 = vand.u32 %v49, 4294901760
    %v1142 = vsub.f32 %v49, %v1141
    %v1143 = vand.u32 %v1142, 4294901760
    %v1144 = vsub.f32 %v1142, %v1143
    %v1145 = vand.u32 %v1144, 4294901760
    %1146 = vmatprep.subr.mxu0 %v1145
    %v1147 = vand.u32 %v48, 4294901760
    %v1148 = vsub.f32 %v48, %v1147
    %v1149 = vand.u32 %v1148, 4294901760
    %v1150 = vsub.f32 %v1148, %v1149
    %v1151 = vand.u32 %v1150, 4294901760
    %1152 = vmatpush1.msra.mxu0 %v1151
    %v1153 = vand.u32 %v53, 4294901760
    %v1154 = vsub.f32 %v53, %v1153
    %v1155 = vand.u32 %v1154, 4294901760
    %v1156 = vsub.f32 %v1154, %v1155
    %v1157 = vand.u32 %v1156, 4294901760
    %1158 = vmatprep.subr.mxu0 %v1157
    %v1159 = vand.u32 %v52, 4294901760
    %v1160 = vsub.f32 %v52, %v1159
    %v1161 = vand.u32 %v1160, 4294901760
    %v1162 = vsub.f32 %v1160, %v1161
    %v1163 = vand.u32 %v1162, 4294901760
    %1164 = vmatpush1.msra.mxu0 %v1163
    %v1165 = vand.u32 %v57, 4294901760
    %v1166 = vsub.f32 %v57, %v1165
    %v1167 = vand.u32 %v1166, 4294901760
    %v1168 = vsub.f32 %v1166, %v1167
    %v1169 = vand.u32 %v1168, 4294901760
    %1170 = vmatprep.subr.mxu0 %v1169
    %v1171 = vand.u32 %v56, 4294901760
    %v1172 = vsub.f32 %v56, %v1171
    %v1173 = vand.u32 %v1172, 4294901760
    %v1174 = vsub.f32 %v1172, %v1173
    %v1175 = vand.u32 %v1174, 4294901760
    %1176 = vmatpush1.msra.mxu0 %v1175
    %v1177 = vand.u32 %v61, 4294901760
    %v1178 = vsub.f32 %v61, %v1177
    %v1179 = vand.u32 %v1178, 4294901760
    %v1180 = vsub.f32 %v1178, %v1179
    %v1181 = vand.u32 %v1180, 4294901760
    %1182 = vmatprep.subr.mxu0 %v1181
    %v1183 = vand.u32 %v60, 4294901760
    %v1184 = vsub.f32 %v60, %v1183
    %v1185 = vand.u32 %v1184, 4294901760
    %v1186 = vsub.f32 %v1184, %v1185
    %v1187 = vand.u32 %v1186, 4294901760
    %1188 = vmatpush1.msra.mxu0 %v1187
    %v1189 = vand.u32 %v65, 4294901760
    %v1190 = vsub.f32 %v65, %v1189
    %v1191 = vand.u32 %v1190, 4294901760
    %v1192 = vsub.f32 %v1190, %v1191
    %v1193 = vand.u32 %v1192, 4294901760
    %1194 = vmatprep.subr.mxu0 %v1193
    %v1195 = vand.u32 %v64, 4294901760
    %v1196 = vsub.f32 %v64, %v1195
    %v1197 = vand.u32 %v1196, 4294901760
    %v1198 = vsub.f32 %v1196, %v1197
    %v1199 = vand.u32 %v1198, 4294901760
    %1200 = vmatpush1.msra.mxu0 %v1199
    %v1201 = vand.u32 %v69, 4294901760
    %v1202 = vsub.f32 %v69, %v1201
    %v1203 = vand.u32 %v1202, 4294901760
    %v1204 = vsub.f32 %v1202, %v1203
    %v1205 = vand.u32 %v1204, 4294901760
    %1206 = vmatprep.subr.mxu0 %v1205
    %v1207 = vand.u32 %v68, 4294901760
    %v1208 = vsub.f32 %v68, %v1207
    %v1209 = vand.u32 %v1208, 4294901760
    %v1210 = vsub.f32 %v1208, %v1209
    %v1211 = vand.u32 %v1210, 4294901760
    %1212 = vmatpush1.msra.mxu0 %v1211
    %v1213 = vand.u32 %v73, 4294901760
    %v1214 = vsub.f32 %v73, %v1213
    %v1215 = vand.u32 %v1214, 4294901760
    %v1216 = vsub.f32 %v1214, %v1215
    %v1217 = vand.u32 %v1216, 4294901760
    %1218 = vmatprep.subr.mxu0 %v1217
    %v1219 = vand.u32 %v72, 4294901760
    %v1220 = vsub.f32 %v72, %v1219
    %v1221 = vand.u32 %v1220, 4294901760
    %v1222 = vsub.f32 %v1220, %v1221
    %v1223 = vand.u32 %v1222, 4294901760
    %1224 = vmatpush1.msra.mxu0 %v1223
    %v1225 = vand.u32 %v77, 4294901760
    %v1226 = vsub.f32 %v77, %v1225
    %v1227 = vand.u32 %v1226, 4294901760
    %v1228 = vsub.f32 %v1226, %v1227
    %v1229 = vand.u32 %v1228, 4294901760
    %1230 = vmatprep.subr.mxu0 %v1229
    %v1231 = vand.u32 %v76, 4294901760
    %v1232 = vsub.f32 %v76, %v1231
    %v1233 = vand.u32 %v1232, 4294901760
    %v1234 = vsub.f32 %v1232, %v1233
    %v1235 = vand.u32 %v1234, 4294901760
    %1236 = vmatpush1.msra.mxu0 %v1235
    %v1237 = vand.u32 %v81, 4294901760
    %v1238 = vsub.f32 %v81, %v1237
    %v1239 = vand.u32 %v1238, 4294901760
    %v1240 = vsub.f32 %v1238, %v1239
    %v1241 = vand.u32 %v1240, 4294901760
    %1242 = vmatprep.subr.mxu0 %v1241
    %v1243 = vand.u32 %v80, 4294901760
    %v1244 = vsub.f32 %v80, %v1243
    %v1245 = vand.u32 %v1244, 4294901760
    %v1246 = vsub.f32 %v1244, %v1245
    %v1247 = vand.u32 %v1246, 4294901760
    %1248 = vmatpush1.msra.mxu0 %v1247
    %v1249 = vand.u32 %v85, 4294901760
    %v1250 = vsub.f32 %v85, %v1249
    %v1251 = vand.u32 %v1250, 4294901760
    %v1252 = vsub.f32 %v1250, %v1251
    %v1253 = vand.u32 %v1252, 4294901760
    %1254 = vmatprep.subr.mxu0 %v1253
    %v1255 = vand.u32 %v84, 4294901760
    %v1256 = vsub.f32 %v84, %v1255
    %v1257 = vand.u32 %v1256, 4294901760
    %v1258 = vsub.f32 %v1256, %v1257
    %v1259 = vand.u32 %v1258, 4294901760
    %1260 = vmatpush1.msra.mxu0 %v1259
    %v1261 = vand.u32 %v89, 4294901760
    %v1262 = vsub.f32 %v89, %v1261
    %v1263 = vand.u32 %v1262, 4294901760
    %v1264 = vsub.f32 %v1262, %v1263
    %v1265 = vand.u32 %v1264, 4294901760
    %1266 = vmatprep.subr.mxu0 %v1265
    %v1267 = vand.u32 %v88, 4294901760
    %v1268 = vsub.f32 %v88, %v1267
    %v1269 = vand.u32 %v1268, 4294901760
    %v1270 = vsub.f32 %v1268, %v1269
    %v1271 = vand.u32 %v1270, 4294901760
    %1272 = vmatpush1.msra.mxu0 %v1271
    %v1273 = vand.u32 %v93, 4294901760
    %v1274 = vsub.f32 %v93, %v1273
    %v1275 = vand.u32 %v1274, 4294901760
    %v1276 = vsub.f32 %v1274, %v1275
    %v1277 = vand.u32 %v1276, 4294901760
    %1278 = vmatprep.subr.mxu0 %v1277
    %v1279 = vand.u32 %v92, 4294901760
    %v1280 = vsub.f32 %v92, %v1279
    %v1281 = vand.u32 %v1280, 4294901760
    %v1282 = vsub.f32 %v1280, %v1281
    %v1283 = vand.u32 %v1282, 4294901760
    %1284 = vmatpush1.msra.mxu0 %v1283
    %v1285 = vand.u32 %v97, 4294901760
    %v1286 = vsub.f32 %v97, %v1285
    %v1287 = vand.u32 %v1286, 4294901760
    %v1288 = vsub.f32 %v1286, %v1287
    %v1289 = vand.u32 %v1288, 4294901760
    %1290 = vmatprep.subr.mxu0 %v1289
    %v1291 = vand.u32 %v96, 4294901760
    %v1292 = vsub.f32 %v96, %v1291
    %v1293 = vand.u32 %v1292, 4294901760
    %v1294 = vsub.f32 %v1292, %v1293
    %v1295 = vand.u32 %v1294, 4294901760
    %1296 = vmatpush1.msra.mxu0 %v1295
    %v1297 = vand.u32 %v101, 4294901760
    %v1298 = vsub.f32 %v101, %v1297
    %v1299 = vand.u32 %v1298, 4294901760
    %v1300 = vsub.f32 %v1298, %v1299
    %v1301 = vand.u32 %v1300, 4294901760
    %1302 = vmatprep.subr.mxu0 %v1301
    %v1303 = vand.u32 %v100, 4294901760
    %v1304 = vsub.f32 %v100, %v1303
    %v1305 = vand.u32 %v1304, 4294901760
    %v1306 = vsub.f32 %v1304, %v1305
    %v1307 = vand.u32 %v1306, 4294901760
    %1308 = vmatpush1.msra.mxu0 %v1307
    %v1309 = vand.u32 %v105, 4294901760
    %v1310 = vsub.f32 %v105, %v1309
    %v1311 = vand.u32 %v1310, 4294901760
    %v1312 = vsub.f32 %v1310, %v1311
    %v1313 = vand.u32 %v1312, 4294901760
    %1314 = vmatprep.subr.mxu0 %v1313
    %v1315 = vand.u32 %v104, 4294901760
    %v1316 = vsub.f32 %v104, %v1315
    %v1317 = vand.u32 %v1316, 4294901760
    %v1318 = vsub.f32 %v1316, %v1317
    %v1319 = vand.u32 %v1318, 4294901760
    %1320 = vmatpush1.msra.mxu0 %v1319
    %1321 = vmatprep.subr.mxu0 0.0
    %1322 = vmatpush1.msra.mxu0 0.0
    %1323 = vmatprep.subr.mxu0 0.0
    %1324 = vmatpush1.msra.mxu0 0.0
    %1325 = vmatprep.subr.mxu0 0.0
    %1326 = vmatpush1.msra.mxu0 0.0
    %1327 = vmatprep.subr.mxu0 0.0
    %1328 = vmatpush1.msra.mxu0 0.0
    %1329 = vmatprep.subr.mxu0 0.0
    %1330 = vmatpush1.msra.mxu0 0.0
    %1331 = vmatprep.subr.mxu0 0.0
    %1332 = vmatpush1.msra.mxu0 0.0
    %1333 = vmatprep.subr.mxu0 0.0
    %1334 = vmatpush1.msra.mxu0 0.0
    %1335 = vmatprep.subr.mxu0 0.0
    %1336 = vmatpush1.msra.mxu0 0.0
    %1337 = vmatprep.subr.mxu0 0.0
    %1338 = vmatpush1.msra.mxu0 0.0
    %1339 = vmatprep.subr.mxu0 0.0
    %1340 = vmatpush1.msra.mxu0 0.0
    %1341 = vmatprep.subr.mxu0 0.0
    %1342 = vmatpush1.msra.mxu0 0.0
    %1343 = vmatprep.subr.mxu0 0.0
    %1344 = vmatpush1.msra.mxu0 0.0
    %1345 = vmatprep.subr.mxu0 0.0
    %1346 = vmatpush1.msra.mxu0 0.0
    %1347 = vmatprep.subr.mxu0 0.0
    %1348 = vmatpush1.msra.mxu0 0.0
    %1349 = vmatprep.subr.mxu0 0.0
    %1350 = vmatpush1.msra.mxu0 0.0
    %1351 = vmatprep.subr.mxu0 0.0
    %1352 = vmatpush1.msra.mxu0 0.0
    %1353 = vmatprep.mubr.f32.mxu0 0.0
    %v1354 = vand.u32 %v40, 4294901760
    %1355 = vmatmul.mubr.f32.gmra.mrb[0].mxu0 %v1354
    %v1356 = vpop.f32.mrb[0].mxu0
    %v1357 = vadd.f32 %v1114, %v1356
    %v1358 = vpop.f32.mrb[0].mxu0
    %v1359 = vadd.f32 %v1116, %v1358
    %1360 = vmatprep.mubr.f32.mxu0 0.0
    %v1361 = vand.u32 %v41, 4294901760
    %1362 = vmatmul.mubr.f32.gmra.mrb[0].mxu0 %v1361
    %v1363 = vpop.f32.mrb[0].mxu0
    %v1364 = vadd.f32 %v1125, %v1363
    %v1365 = vpop.f32.mrb[0].mxu0
    %v1366 = vadd.f32 %v1127, %v1365
    %1367 = vdwg.mxu0
    %v1368 = vand.u32 %v45, 4294901760
    %v1369 = vsub.f32 %v45, %v1368
    %1370 = vmatprep.subr.mxu0 %v1369
    %v1371 = vand.u32 %v44, 4294901760
    %v1372 = vsub.f32 %v44, %v1371
    %1373 = vmatpush1.msra.mxu0 %v1372
    %v1374 = vand.u32 %v49, 4294901760
    %v1375 = vsub.f32 %v49, %v1374
    %1376 = vmatprep.subr.mxu0 %v1375
    %v1377 = vand.u32 %v48, 4294901760
    %v1378 = vsub.f32 %v48, %v1377
    %1379 = vmatpush1.msra.mxu0 %v1378
    %v1380 = vand.u32 %v53, 4294901760
    %v1381 = vsub.f32 %v53, %v1380
    %1382 = vmatprep.subr.mxu0 %v1381
    %v1383 = vand.u32 %v52, 4294901760
    %v1384 = vsub.f32 %v52, %v1383
    %1385 = vmatpush1.msra.mxu0 %v1384
    %v1386 = vand.u32 %v57, 4294901760
    %v1387 = vsub.f32 %v57, %v1386
    %1388 = vmatprep.subr.mxu0 %v1387
    %v1389 = vand.u32 %v56, 4294901760
    %v1390 = vsub.f32 %v56, %v1389
    %1391 = vmatpush1.msra.mxu0 %v1390
    %v1392 = vand.u32 %v61, 4294901760
    %v1393 = vsub.f32 %v61, %v1392
    %1394 = vmatprep.subr.mxu0 %v1393
    %v1395 = vand.u32 %v60, 4294901760
    %v1396 = vsub.f32 %v60, %v1395
    %1397 = vmatpush1.msra.mxu0 %v1396
    %v1398 = vand.u32 %v65, 4294901760
    %v1399 = vsub.f32 %v65, %v1398
    %1400 = vmatprep.subr.mxu0 %v1399
    %v1401 = vand.u32 %v64, 4294901760
    %v1402 = vsub.f32 %v64, %v1401
    %1403 = vmatpush1.msra.mxu0 %v1402
    %v1404 = vand.u32 %v69, 4294901760
    %v1405 = vsub.f32 %v69, %v1404
    %1406 = vmatprep.subr.mxu0 %v1405
    %v1407 = vand.u32 %v68, 4294901760
    %v1408 = vsub.f32 %v68, %v1407
    %1409 = vmatpush1.msra.mxu0 %v1408
    %v1410 = vand.u32 %v73, 4294901760
    %v1411 = vsub.f32 %v73, %v1410
    %1412 = vmatprep.subr.mxu0 %v1411
    %v1413 = vand.u32 %v72, 4294901760
    %v1414 = vsub.f32 %v72, %v1413
    %1415 = vmatpush1.msra.mxu0 %v1414
    %v1416 = vand.u32 %v77, 4294901760
    %v1417 = vsub.f32 %v77, %v1416
    %1418 = vmatprep.subr.mxu0 %v1417
    %v1419 = vand.u32 %v76, 4294901760
    %v1420 = vsub.f32 %v76, %v1419
    %1421 = vmatpush1.msra.mxu0 %v1420
    %v1422 = vand.u32 %v81, 4294901760
    %v1423 = vsub.f32 %v81, %v1422
    %1424 = vmatprep.subr.mxu0 %v1423
    %v1425 = vand.u32 %v80, 4294901760
    %v1426 = vsub.f32 %v80, %v1425
    %1427 = vmatpush1.msra.mxu0 %v1426
    %v1428 = vand.u32 %v85, 4294901760
    %v1429 = vsub.f32 %v85, %v1428
    %1430 = vmatprep.subr.mxu0 %v1429
    %v1431 = vand.u32 %v84, 4294901760
    %v1432 = vsub.f32 %v84, %v1431
    %1433 = vmatpush1.msra.mxu0 %v1432
    %v1434 = vand.u32 %v89, 4294901760
    %v1435 = vsub.f32 %v89, %v1434
    %1436 = vmatprep.subr.mxu0 %v1435
    %v1437 = vand.u32 %v88, 4294901760
    %v1438 = vsub.f32 %v88, %v1437
    %1439 = vmatpush1.msra.mxu0 %v1438
    %v1440 = vand.u32 %v93, 4294901760
    %v1441 = vsub.f32 %v93, %v1440
    %1442 = vmatprep.subr.mxu0 %v1441
    %v1443 = vand.u32 %v92, 4294901760
    %v1444 = vsub.f32 %v92, %v1443
    %1445 = vmatpush1.msra.mxu0 %v1444
    %v1446 = vand.u32 %v97, 4294901760
    %v1447 = vsub.f32 %v97, %v1446
    %1448 = vmatprep.subr.mxu0 %v1447
    %v1449 = vand.u32 %v96, 4294901760
    %v1450 = vsub.f32 %v96, %v1449
    %1451 = vmatpush1.msra.mxu0 %v1450
    %v1452 = vand.u32 %v101, 4294901760
    %v1453 = vsub.f32 %v101, %v1452
    %1454 = vmatprep.subr.mxu0 %v1453
    %v1455 = vand.u32 %v100, 4294901760
    %v1456 = vsub.f32 %v100, %v1455
    %1457 = vmatpush1.msra.mxu0 %v1456
    %v1458 = vand.u32 %v105, 4294901760
    %v1459 = vsub.f32 %v105, %v1458
    %1460 = vmatprep.subr.mxu0 %v1459
    %v1461 = vand.u32 %v104, 4294901760
    %v1462 = vsub.f32 %v104, %v1461
    %1463 = vmatpush1.msra.mxu0 %v1462
    %1464 = vmatprep.subr.mxu0 0.0
    %1465 = vmatpush1.msra.mxu0 0.0
    %1466 = vmatprep.subr.mxu0 0.0
    %1467 = vmatpush1.msra.mxu0 0.0
    %1468 = vmatprep.subr.mxu0 0.0
    %1469 = vmatpush1.msra.mxu0 0.0
    %1470 = vmatprep.subr.mxu0 0.0
    %1471 = vmatpush1.msra.mxu0 0.0
    %1472 = vmatprep.subr.mxu0 0.0
    %1473 = vmatpush1.msra.mxu0 0.0
    %1474 = vmatprep.subr.mxu0 0.0
    %1475 = vmatpush1.msra.mxu0 0.0
    %1476 = vmatprep.subr.mxu0 0.0
    %1477 = vmatpush1.msra.mxu0 0.0
    %1478 = vmatprep.subr.mxu0 0.0
    %1479 = vmatpush1.msra.mxu0 0.0
    %1480 = vmatprep.subr.mxu0 0.0
    %1481 = vmatpush1.msra.mxu0 0.0
    %1482 = vmatprep.subr.mxu0 0.0
    %1483 = vmatpush1.msra.mxu0 0.0
    %1484 = vmatprep.subr.mxu0 0.0
    %1485 = vmatpush1.msra.mxu0 0.0
    %1486 = vmatprep.subr.mxu0 0.0
    %1487 = vmatpush1.msra.mxu0 0.0
    %1488 = vmatprep.subr.mxu0 0.0
    %1489 = vmatpush1.msra.mxu0 0.0
    %1490 = vmatprep.subr.mxu0 0.0
    %1491 = vmatpush1.msra.mxu0 0.0
    %1492 = vmatprep.subr.mxu0 0.0
    %1493 = vmatpush1.msra.mxu0 0.0
    %1494 = vmatprep.subr.mxu0 0.0
    %1495 = vmatpush1.msra.mxu0 0.0
    %1496 = vmatprep.mubr.f32.mxu0 0.0
    %v1497 = vand.u32 %v40, 4294901760
    %v1498 = vsub.f32 %v40, %v1497
    %1499 = vmatmul.mubr.f32.gmra.mrb[0].mxu0 %v1498
    %v1500 = vpop.f32.mrb[0].mxu0
    %v1501 = vadd.f32 %v1357, %v1500
    %v1502 = vpop.f32.mrb[0].mxu0
    %v1503 = vadd.f32 %v1359, %v1502
    %1504 = vmatprep.mubr.f32.mxu0 0.0
    %v1505 = vand.u32 %v41, 4294901760
    %v1506 = vsub.f32 %v41, %v1505
    %1507 = vmatmul.mubr.f32.gmra.mrb[0].mxu0 %v1506
    %v1508 = vpop.f32.mrb[0].mxu0
    %v1509 = vadd.f32 %v1364, %v1508
    %v1510 = vpop.f32.mrb[0].mxu0
    %v1511 = vadd.f32 %v1366, %v1510
    %1512 = vdwg.mxu0
    %v1513 = vand.u32 %v45, 4294901760
    %1514 = vmatprep.subr.mxu0 %v1513
    %v1515 = vand.u32 %v44, 4294901760
    %1516 = vmatpush1.msra.mxu0 %v1515
    %v1517 = vand.u32 %v49, 4294901760
    %1518 = vmatprep.subr.mxu0 %v1517
    %v1519 = vand.u32 %v48, 4294901760
    %1520 = vmatpush1.msra.mxu0 %v1519
    %v1521 = vand.u32 %v53, 4294901760
    %1522 = vmatprep.subr.mxu0 %v1521
    %v1523 = vand.u32 %v52, 4294901760
    %1524 = vmatpush1.msra.mxu0 %v1523
    %v1525 = vand.u32 %v57, 4294901760
    %1526 = vmatprep.subr.mxu0 %v1525
    %v1527 = vand.u32 %v56, 4294901760
    %1528 = vmatpush1.msra.mxu0 %v1527
    %v1529 = vand.u32 %v61, 4294901760
    %1530 = vmatprep.subr.mxu0 %v1529
    %v1531 = vand.u32 %v60, 4294901760
    %1532 = vmatpush1.msra.mxu0 %v1531
    %v1533 = vand.u32 %v65, 4294901760
    %1534 = vmatprep.subr.mxu0 %v1533
    %v1535 = vand.u32 %v64, 4294901760
    %1536 = vmatpush1.msra.mxu0 %v1535
    %v1537 = vand.u32 %v69, 4294901760
    %1538 = vmatprep.subr.mxu0 %v1537
    %v1539 = vand.u32 %v68, 4294901760
    %1540 = vmatpush1.msra.mxu0 %v1539
    %v1541 = vand.u32 %v73, 4294901760
    %1542 = vmatprep.subr.mxu0 %v1541
    %v1543 = vand.u32 %v72, 4294901760
    %1544 = vmatpush1.msra.mxu0 %v1543
    %v1545 = vand.u32 %v77, 4294901760
    %1546 = vmatprep.subr.mxu0 %v1545
    %v1547 = vand.u32 %v76, 4294901760
    %1548 = vmatpush1.msra.mxu0 %v1547
    %v1549 = vand.u32 %v81, 4294901760
    %1550 = vmatprep.subr.mxu0 %v1549
    %v1551 = vand.u32 %v80, 4294901760
    %1552 = vmatpush1.msra.mxu0 %v1551
    %v1553 = vand.u32 %v85, 4294901760
    %1554 = vmatprep.subr.mxu0 %v1553
    %v1555 = vand.u32 %v84, 4294901760
    %1556 = vmatpush1.msra.mxu0 %v1555
    %v1557 = vand.u32 %v89, 4294901760
    %1558 = vmatprep.subr.mxu0 %v1557
    %v1559 = vand.u32 %v88, 4294901760
    %1560 = vmatpush1.msra.mxu0 %v1559
    %v1561 = vand.u32 %v93, 4294901760
    %1562 = vmatprep.subr.mxu0 %v1561
    %v1563 = vand.u32 %v92, 4294901760
    %1564 = vmatpush1.msra.mxu0 %v1563
    %v1565 = vand.u32 %v97, 4294901760
    %1566 = vmatprep.subr.mxu0 %v1565
    %v1567 = vand.u32 %v96, 4294901760
    %1568 = vmatpush1.msra.mxu0 %v1567
    %v1569 = vand.u32 %v101, 4294901760
    %1570 = vmatprep.subr.mxu0 %v1569
    %v1571 = vand.u32 %v100, 4294901760
    %1572 = vmatpush1.msra.mxu0 %v1571
    %v1573 = vand.u32 %v105, 4294901760
    %1574 = vmatprep.subr.mxu0 %v1573
    %v1575 = vand.u32 %v104, 4294901760
    %1576 = vmatpush1.msra.mxu0 %v1575
    %1577 = vmatprep.subr.mxu0 0.0
    %1578 = vmatpush1.msra.mxu0 0.0
    %1579 = vmatprep.subr.mxu0 0.0
    %1580 = vmatpush1.msra.mxu0 0.0
    %1581 = vmatprep.subr.mxu0 0.0
    %1582 = vmatpush1.msra.mxu0 0.0
    %1583 = vmatprep.subr.mxu0 0.0
    %1584 = vmatpush1.msra.mxu0 0.0
    %1585 = vmatprep.subr.mxu0 0.0
    %1586 = vmatpush1.msra.mxu0 0.0
    %1587 = vmatprep.subr.mxu0 0.0
    %1588 = vmatpush1.msra.mxu0 0.0
    %1589 = vmatprep.subr.mxu0 0.0
    %1590 = vmatpush1.msra.mxu0 0.0
    %1591 = vmatprep.subr.mxu0 0.0
    %1592 = vmatpush1.msra.mxu0 0.0
    %1593 = vmatprep.subr.mxu0 0.0
    %1594 = vmatpush1.msra.mxu0 0.0
    %1595 = vmatprep.subr.mxu0 0.0
    %1596 = vmatpush1.msra.mxu0 0.0
    %1597 = vmatprep.subr.mxu0 0.0
    %1598 = vmatpush1.msra.mxu0 0.0
    %1599 = vmatprep.subr.mxu0 0.0
    %1600 = vmatpush1.msra.mxu0 0.0
    %1601 = vmatprep.subr.mxu0 0.0
    %1602 = vmatpush1.msra.mxu0 0.0
    %1603 = vmatprep.subr.mxu0 0.0
    %1604 = vmatpush1.msra.mxu0 0.0
    %1605 = vmatprep.subr.mxu0 0.0
    %1606 = vmatpush1.msra.mxu0 0.0
    %1607 = vmatprep.subr.mxu0 0.0
    %1608 = vmatpush1.msra.mxu0 0.0
    %1609 = vmatprep.mubr.f32.mxu0 0.0
    %v1610 = vand.u32 %v40, 4294901760
    %v1611 = vsub.f32 %v40, %v1610
    %v1612 = vand.u32 %v1611, 4294901760
    %1613 = vmatmul.mubr.f32.gmra.mrb[0].mxu0 %v1612
    %v1614 = vpop.f32.mrb[0].mxu0
    %v1615 = vadd.f32 %v1501, %v1614
    %v1616 = vpop.f32.mrb[0].mxu0
    %v1617 = vadd.f32 %v1503, %v1616
    %1618 = vmatprep.mubr.f32.mxu0 0.0
    %v1619 = vand.u32 %v41, 4294901760
    %v1620 = vsub.f32 %v41, %v1619
    %v1621 = vand.u32 %v1620, 4294901760
    %1622 = vmatmul.mubr.f32.gmra.mrb[0].mxu0 %v1621
    %v1623 = vpop.f32.mrb[0].mxu0
    %v1624 = vadd.f32 %v1509, %v1623
    %v1625 = vpop.f32.mrb[0].mxu0
    %v1626 = vadd.f32 %v1511, %v1625
    %1627 = vdwg.mxu0
    %v1628 = vand.u32 %v45, 4294901760
    %v1629 = vsub.f32 %v45, %v1628
    %v1630 = vand.u32 %v1629, 4294901760
    %1631 = vmatprep.subr.mxu0 %v1630
    %v1632 = vand.u32 %v44, 4294901760
    %v1633 = vsub.f32 %v44, %v1632
    %v1634 = vand.u32 %v1633, 4294901760
    %1635 = vmatpush1.msra.mxu0 %v1634
    %v1636 = vand.u32 %v49, 4294901760
    %v1637 = vsub.f32 %v49, %v1636
    %v1638 = vand.u32 %v1637, 4294901760
    %1639 = vmatprep.subr.mxu0 %v1638
    %v1640 = vand.u32 %v48, 4294901760
    %v1641 = vsub.f32 %v48, %v1640
    %v1642 = vand.u32 %v1641, 4294901760
    %1643 = vmatpush1.msra.mxu0 %v1642
    %v1644 = vand.u32 %v53, 4294901760
    %v1645 = vsub.f32 %v53, %v1644
    %v1646 = vand.u32 %v1645, 4294901760
    %1647 = vmatprep.subr.mxu0 %v1646
    %v1648 = vand.u32 %v52, 4294901760
    %v1649 = vsub.f32 %v52, %v1648
    %v1650 = vand.u32 %v1649, 4294901760
    %1651 = vmatpush1.msra.mxu0 %v1650
    %v1652 = vand.u32 %v57, 4294901760
    %v1653 = vsub.f32 %v57, %v1652
    %v1654 = vand.u32 %v1653, 4294901760
    %1655 = vmatprep.subr.mxu0 %v1654
    %v1656 = vand.u32 %v56, 4294901760
    %v1657 = vsub.f32 %v56, %v1656
    %v1658 = vand.u32 %v1657, 4294901760
    %1659 = vmatpush1.msra.mxu0 %v1658
    %v1660 = vand.u32 %v61, 4294901760
    %v1661 = vsub.f32 %v61, %v1660
    %v1662 = vand.u32 %v1661, 4294901760
    %1663 = vmatprep.subr.mxu0 %v1662
    %v1664 = vand.u32 %v60, 4294901760
    %v1665 = vsub.f32 %v60, %v1664
    %v1666 = vand.u32 %v1665, 4294901760
    %1667 = vmatpush1.msra.mxu0 %v1666
    %v1668 = vand.u32 %v65, 4294901760
    %v1669 = vsub.f32 %v65, %v1668
    %v1670 = vand.u32 %v1669, 4294901760
    %1671 = vmatprep.subr.mxu0 %v1670
    %v1672 = vand.u32 %v64, 4294901760
    %v1673 = vsub.f32 %v64, %v1672
    %v1674 = vand.u32 %v1673, 4294901760
    %1675 = vmatpush1.msra.mxu0 %v1674
    %v1676 = vand.u32 %v69, 4294901760
    %v1677 = vsub.f32 %v69, %v1676
    %v1678 = vand.u32 %v1677, 4294901760
    %1679 = vmatprep.subr.mxu0 %v1678
    %v1680 = vand.u32 %v68, 4294901760
    %v1681 = vsub.f32 %v68, %v1680
    %v1682 = vand.u32 %v1681, 4294901760
    %1683 = vmatpush1.msra.mxu0 %v1682
    %v1684 = vand.u32 %v73, 4294901760
    %v1685 = vsub.f32 %v73, %v1684
    %v1686 = vand.u32 %v1685, 4294901760
    %1687 = vmatprep.subr.mxu0 %v1686
    %v1688 = vand.u32 %v72, 4294901760
    %v1689 = vsub.f32 %v72, %v1688
    %v1690 = vand.u32 %v1689, 4294901760
    %1691 = vmatpush1.msra.mxu0 %v1690
    %v1692 = vand.u32 %v77, 4294901760
    %v1693 = vsub.f32 %v77, %v1692
    %v1694 = vand.u32 %v1693, 4294901760
    %1695 = vmatprep.subr.mxu0 %v1694
    %v1696 = vand.u32 %v76, 4294901760
    %v1697 = vsub.f32 %v76, %v1696
    %v1698 = vand.u32 %v1697, 4294901760
    %1699 = vmatpush1.msra.mxu0 %v1698
    %v1700 = vand.u32 %v81, 4294901760
    %v1701 = vsub.f32 %v81, %v1700
    %v1702 = vand.u32 %v1701, 4294901760
    %1703 = vmatprep.subr.mxu0 %v1702
    %v1704 = vand.u32 %v80, 4294901760
    %v1705 = vsub.f32 %v80, %v1704
    %v1706 = vand.u32 %v1705, 4294901760
    %1707 = vmatpush1.msra.mxu0 %v1706
    %v1708 = vand.u32 %v85, 4294901760
    %v1709 = vsub.f32 %v85, %v1708
    %v1710 = vand.u32 %v1709, 4294901760
    %1711 = vmatprep.subr.mxu0 %v1710
    %v1712 = vand.u32 %v84, 4294901760
    %v1713 = vsub.f32 %v84, %v1712
    %v1714 = vand.u32 %v1713, 4294901760
    %1715 = vmatpush1.msra.mxu0 %v1714
    %v1716 = vand.u32 %v89, 4294901760
    %v1717 = vsub.f32 %v89, %v1716
    %v1718 = vand.u32 %v1717, 4294901760
    %1719 = vmatprep.subr.mxu0 %v1718
    %v1720 = vand.u32 %v88, 4294901760
    %v1721 = vsub.f32 %v88, %v1720
    %v1722 = vand.u32 %v1721, 4294901760
    %1723 = vmatpush1.msra.mxu0 %v1722
    %v1724 = vand.u32 %v93, 4294901760
    %v1725 = vsub.f32 %v93, %v1724
    %v1726 = vand.u32 %v1725, 4294901760
    %1727 = vmatprep.subr.mxu0 %v1726
    %v1728 = vand.u32 %v92, 4294901760
    %v1729 = vsub.f32 %v92, %v1728
    %v1730 = vand.u32 %v1729, 4294901760
    %1731 = vmatpush1.msra.mxu0 %v1730
    %v1732 = vand.u32 %v97, 4294901760
    %v1733 = vsub.f32 %v97, %v1732
    %v1734 = vand.u32 %v1733, 4294901760
    %1735 = vmatprep.subr.mxu0 %v1734
    %v1736 = vand.u32 %v96, 4294901760
    %v1737 = vsub.f32 %v96, %v1736
    %v1738 = vand.u32 %v1737, 4294901760
    %1739 = vmatpush1.msra.mxu0 %v1738
    %v1740 = vand.u32 %v101, 4294901760
    %v1741 = vsub.f32 %v101, %v1740
    %v1742 = vand.u32 %v1741, 4294901760
    %1743 = vmatprep.subr.mxu0 %v1742
    %v1744 = vand.u32 %v100, 4294901760
    %v1745 = vsub.f32 %v100, %v1744
    %v1746 = vand.u32 %v1745, 4294901760
    %1747 = vmatpush1.msra.mxu0 %v1746
    %v1748 = vand.u32 %v105, 4294901760
    %v1749 = vsub.f32 %v105, %v1748
    %v1750 = vand.u32 %v1749, 4294901760
    %1751 = vmatprep.subr.mxu0 %v1750
    %v1752 = vand.u32 %v104, 4294901760
    %v1753 = vsub.f32 %v104, %v1752
    %v1754 = vand.u32 %v1753, 4294901760
    %1755 = vmatpush1.msra.mxu0 %v1754
    %1756 = vmatprep.subr.mxu0 0.0
    %1757 = vmatpush1.msra.mxu0 0.0
    %1758 = vmatprep.subr.mxu0 0.0
    %1759 = vmatpush1.msra.mxu0 0.0
    %1760 = vmatprep.subr.mxu0 0.0
    %1761 = vmatpush1.msra.mxu0 0.0
    %1762 = vmatprep.subr.mxu0 0.0
    %1763 = vmatpush1.msra.mxu0 0.0
    %1764 = vmatprep.subr.mxu0 0.0
    %1765 = vmatpush1.msra.mxu0 0.0
    %1766 = vmatprep.subr.mxu0 0.0
    %1767 = vmatpush1.msra.mxu0 0.0
    %1768 = vmatprep.subr.mxu0 0.0
    %1769 = vmatpush1.msra.mxu0 0.0
    %1770 = vmatprep.subr.mxu0 0.0
    %1771 = vmatpush1.msra.mxu0 0.0
    %1772 = vmatprep.subr.mxu0 0.0
    %1773 = vmatpush1.msra.mxu0 0.0
    %1774 = vmatprep.subr.mxu0 0.0
    %1775 = vmatpush1.msra.mxu0 0.0
    %1776 = vmatprep.subr.mxu0 0.0
    %1777 = vmatpush1.msra.mxu0 0.0
    %1778 = vmatprep.subr.mxu0 0.0
    %1779 = vmatpush1.msra.mxu0 0.0
    %1780 = vmatprep.subr.mxu0 0.0
    %1781 = vmatpush1.msra.mxu0 0.0
    %1782 = vmatprep.subr.mxu0 0.0
    %1783 = vmatpush1.msra.mxu0 0.0
    %1784 = vmatprep.subr.mxu0 0.0
    %1785 = vmatpush1.msra.mxu0 0.0
    %1786 = vmatprep.subr.mxu0 0.0
    %1787 = vmatpush1.msra.mxu0 0.0
    %1788 = vmatprep.mubr.f32.mxu0 0.0
    %v1789 = vand.u32 %v40, 4294901760
    %1790 = vmatmul.mubr.f32.gmra.mrb[0].mxu0 %v1789
    %v1791 = vpop.f32.mrb[0].mxu0
    %v1792 = vadd.f32 %v1615, %v1791
    %v1793 = vpop.f32.mrb[0].mxu0
    %v1794 = vadd.f32 %v1617, %v1793
    %1795 = vmatprep.mubr.f32.mxu0 0.0
    %v1796 = vand.u32 %v41, 4294901760
    %1797 = vmatmul.mubr.f32.gmra.mrb[0].mxu0 %v1796
    %v1798 = vpop.f32.mrb[0].mxu0
    %v1799 = vadd.f32 %v1624, %v1798
    %v1800 = vpop.f32.mrb[0].mxu0
    %v1801 = vadd.f32 %v1626, %v1800
    %1802 = vdwg.mxu0
    %v1803 = vand.u32 %v45, 4294901760
    %1804 = vmatprep.subr.mxu0 %v1803
    %v1805 = vand.u32 %v44, 4294901760
    %1806 = vmatpush1.msra.mxu0 %v1805
    %v1807 = vand.u32 %v49, 4294901760
    %1808 = vmatprep.subr.mxu0 %v1807
    %v1809 = vand.u32 %v48, 4294901760
    %1810 = vmatpush1.msra.mxu0 %v1809
    %v1811 = vand.u32 %v53, 4294901760
    %1812 = vmatprep.subr.mxu0 %v1811
    %v1813 = vand.u32 %v52, 4294901760
    %1814 = vmatpush1.msra.mxu0 %v1813
    %v1815 = vand.u32 %v57, 4294901760
    %1816 = vmatprep.subr.mxu0 %v1815
    %v1817 = vand.u32 %v56, 4294901760
    %1818 = vmatpush1.msra.mxu0 %v1817
    %v1819 = vand.u32 %v61, 4294901760
    %1820 = vmatprep.subr.mxu0 %v1819
    %v1821 = vand.u32 %v60, 4294901760
    %1822 = vmatpush1.msra.mxu0 %v1821
    %v1823 = vand.u32 %v65, 4294901760
    %1824 = vmatprep.subr.mxu0 %v1823
    %v1825 = vand.u32 %v64, 4294901760
    %1826 = vmatpush1.msra.mxu0 %v1825
    %v1827 = vand.u32 %v69, 4294901760
    %1828 = vmatprep.subr.mxu0 %v1827
    %v1829 = vand.u32 %v68, 4294901760
    %1830 = vmatpush1.msra.mxu0 %v1829
    %v1831 = vand.u32 %v73, 4294901760
    %1832 = vmatprep.subr.mxu0 %v1831
    %v1833 = vand.u32 %v72, 4294901760
    %1834 = vmatpush1.msra.mxu0 %v1833
    %v1835 = vand.u32 %v77, 4294901760
    %1836 = vmatprep.subr.mxu0 %v1835
    %v1837 = vand.u32 %v76, 4294901760
    %1838 = vmatpush1.msra.mxu0 %v1837
    %v1839 = vand.u32 %v81, 4294901760
    %1840 = vmatprep.subr.mxu0 %v1839
    %v1841 = vand.u32 %v80, 4294901760
    %1842 = vmatpush1.msra.mxu0 %v1841
    %v1843 = vand.u32 %v85, 4294901760
    %1844 = vmatprep.subr.mxu0 %v1843
    %v1845 = vand.u32 %v84, 4294901760
    %1846 = vmatpush1.msra.mxu0 %v1845
    %v1847 = vand.u32 %v89, 4294901760
    %1848 = vmatprep.subr.mxu0 %v1847
    %v1849 = vand.u32 %v88, 4294901760
    %1850 = vmatpush1.msra.mxu0 %v1849
    %v1851 = vand.u32 %v93, 4294901760
    %1852 = vmatprep.subr.mxu0 %v1851
    %v1853 = vand.u32 %v92, 4294901760
    %1854 = vmatpush1.msra.mxu0 %v1853
    %v1855 = vand.u32 %v97, 4294901760
    %1856 = vmatprep.subr.mxu0 %v1855
    %v1857 = vand.u32 %v96, 4294901760
    %1858 = vmatpush1.msra.mxu0 %v1857
    %v1859 = vand.u32 %v101, 4294901760
    %1860 = vmatprep.subr.mxu0 %v1859
    %v1861 = vand.u32 %v100, 4294901760
    %1862 = vmatpush1.msra.mxu0 %v1861
    %v1863 = vand.u32 %v105, 4294901760
    %1864 = vmatprep.subr.mxu0 %v1863
    %v1865 = vand.u32 %v104, 4294901760
    %1866 = vmatpush1.msra.mxu0 %v1865
    %1867 = vmatprep.subr.mxu0 0.0
    %1868 = vmatpush1.msra.mxu0 0.0
    %1869 = vmatprep.subr.mxu0 0.0
    %1870 = vmatpush1.msra.mxu0 0.0
    %1871 = vmatprep.subr.mxu0 0.0
    %1872 = vmatpush1.msra.mxu0 0.0
    %1873 = vmatprep.subr.mxu0 0.0
    %1874 = vmatpush1.msra.mxu0 0.0
    %1875 = vmatprep.subr.mxu0 0.0
    %1876 = vmatpush1.msra.mxu0 0.0
    %1877 = vmatprep.subr.mxu0 0.0
    %1878 = vmatpush1.msra.mxu0 0.0
    %1879 = vmatprep.subr.mxu0 0.0
    %1880 = vmatpush1.msra.mxu0 0.0
    %1881 = vmatprep.subr.mxu0 0.0
    %1882 = vmatpush1.msra.mxu0 0.0
    %1883 = vmatprep.subr.mxu0 0.0
    %1884 = vmatpush1.msra.mxu0 0.0
    %1885 = vmatprep.subr.mxu0 0.0
    %1886 = vmatpush1.msra.mxu0 0.0
    %1887 = vmatprep.subr.mxu0 0.0
    %1888 = vmatpush1.msra.mxu0 0.0
    %1889 = vmatprep.subr.mxu0 0.0
    %1890 = vmatpush1.msra.mxu0 0.0
    %1891 = vmatprep.subr.mxu0 0.0
    %1892 = vmatpush1.msra.mxu0 0.0
    %1893 = vmatprep.subr.mxu0 0.0
    %1894 = vmatpush1.msra.mxu0 0.0
    %1895 = vmatprep.subr.mxu0 0.0
    %1896 = vmatpush1.msra.mxu0 0.0
    %1897 = vmatprep.subr.mxu0 0.0
    %1898 = vmatpush1.msra.mxu0 0.0
    %1899 = vmatprep.mubr.f32.mxu0 0.0
    %v1900 = vand.u32 %v40, 4294901760
    %1901 = vmatmul.mubr.f32.gmra.mrb[0].mxu0 %v1900
    %v1902 = vpop.f32.mrb[0].mxu0
    %v1903 = vadd.f32 %v1792, %v1902
    %v1904 = vpop.f32.mrb[0].mxu0
    %v1905 = vadd.f32 %v1794, %v1904
    %1906 = vmatprep.mubr.f32.mxu0 0.0
    %v1907 = vand.u32 %v41, 4294901760
    %1908 = vmatmul.mubr.f32.gmra.mrb[0].mxu0 %v1907
    %v1909 = vpop.f32.mrb[0].mxu0
    %v1910 = vadd.f32 %v1799, %v1909
    %v1911 = vpop.f32.mrb[0].mxu0
    %v1912 = vadd.f32 %v1801, %v1911
    %1913 = vdwg.mxu0
    %1914 = vst [vmem:[#allocation7] sm:$0xff] %v999
    %1915 = vst [vmem:[#allocation7 + $0x8] sm:$0xff] %v1001
    %1916 = vst [vmem:[#allocation7 + $0x10] sm:$0xff] %v1903
    %1917 = vst [vmem:[#allocation7 + $0x18] sm:$0xff] %v1905
    %1918 = vst [vmem:[#allocation7 + $0x20] sm:$0xff] %v1006
    %1919 = vst [vmem:[#allocation7 + $0x28] sm:$0xff] %v1008
    %1920 = vst [vmem:[#allocation7 + $0x30] sm:$0xff] %v1910
    %1921 = vst [vmem:[#allocation7 + $0x38] sm:$0xff] %v1912
    // Predicated region
    $region18: #{tpu_custom_call.1} parent=1 // pred_check
      _
    $region19: #{tpu_custom_call.1} parent=1 // pred_check_branch
      %1923 = sbr.rel (0) target = $region21
    $region20: #{tpu_custom_call.1} parent=1 // pred_region
      %s1925 = ssub.s32 1024, 1024
      %1926 = vsyncadd [#allocation4], %s1925
      %s1927 = sshll.u32 [#allocation7], 4
      %s1928 = int_to_ptr.vmem [resolvable:$true] %s1927
      %1933 = dma.vmem_to_hbm [thread:$0]  %s1928, 1024, %s2, [#allocation4], 512, 512, 32
    $region21: #{tpu_custom_call.1} parent=1 // pred_fallthru
      _
    // Predicated region
    $region22: #{tpu_custom_call.1} parent=1 // pred_check
      _
    $region23: #{tpu_custom_call.1} parent=1 // pred_check_branch
      %1935 = sbr.rel (0) target = $region25
    $region24: #{tpu_custom_call.1} parent=1 // pred_region
      %1936 = dma.done [#allocation4], 1024
    $region25: #{tpu_custom_call.1} parent=1 // pred_fallthru
      _
    %1937 = vsyncpa [#allocation3], 1
    %1938 = vsyncpa [#allocation6], 1
    %1939 = vsyncpa [#allocation4], 1

</llo_original>
